<compile_context>
chip_gen: v7x
topology: tpu7x:2x2x1
jax: 0.10.0
libtpu: 0.0.40
codegen_flags: <defaults>
</compile_context>

<pallas_src>
import functools
import math

import jax
import jax.numpy as jnp
from jax.experimental import pallas as pl
from jax.experimental.pallas import tpu as pltpu


# ----------------------------------------------------------------------------
# VMEM budget helper
# ----------------------------------------------------------------------------
@functools.lru_cache(maxsize=1)
def _vmem_limit_bytes():
    """~3/4 of physical VMEM (128 MiB on v5e/v6e, 64 MiB per TC on v7x)."""
    try:
        cap = int(pltpu.get_tpu_info().vmem_capacity_bytes)
    except Exception:  # query unavailable -> conservative default
        cap = 64 * 1024 * 1024
    return max(32 * 1024 * 1024, cap * 3 // 4)


# ----------------------------------------------------------------------------
# Pallas kernel: one full GRU layer (projection + recurrence [+ FC head])
# ----------------------------------------------------------------------------
def _gru_layer_kernel(*refs, seq_len, hidden_dim, num_dirs, fuse_fc, unroll):
    """Whole layer in one kernel; everything is VMEM-resident.

    Ref order (inputs, outputs, scratch):
      x      (T, B, Din)
      w_ih   (Din, nd*3H)   concat of per-direction W_ih^T (gate order r,z,n)
      b_ih   (1, nd*3H)
      w_hh   (nd*H, nd*3H)  block-diagonal of per-direction W_hh^T
      b_hh   (1, nd*3H)
      [w_fc  (nd*H, O), b_fc (1, O)]            if fuse_fc
      out    (T, B, nd*H)                        direction d owns lanes d*H:(d+1)*H
      [out_fc (T, B, O)]                         if fuse_fc
      gi     (T, B, nd*3H)  VMEM scratch for the hoisted input projection
    Direction 0 runs forward in time; direction 1 (if present) runs reversed.
    """
    T, H, nd = seq_len, hidden_dim, num_dirs
    it = iter(refs)
    x_ref = next(it)
    wih_ref = next(it)
    bih_ref = next(it)
    whh_ref = next(it)
    bhh_ref = next(it)
    if fuse_fc:
        wfc_ref = next(it)
        bfc_ref = next(it)
    out_ref = next(it)
    if fuse_fc:
        out_fc_ref = next(it)
    gi_ref = next(it)                       # VMEM scratch (T, B, nd*3H)

    B = x_ref.shape[1]
    Din = x_ref.shape[2]

    # ---- Hoisted input projection, fused in-kernel: one batched MXU pass for
    #      all timesteps and all directions; result stays in VMEM.
    x_flat = x_ref[...].reshape(T * B, Din).astype(jnp.float32)
    gi_flat = (jnp.dot(x_flat, wih_ref[...].astype(jnp.float32),
                       preferred_element_type=jnp.float32)
               + bih_ref[...].astype(jnp.float32))
    gi_ref[...] = gi_flat.reshape(T, B, nd * 3 * H)

    # ---- Recurrence. Weights loaded once, live for the whole sequence.
    whh_bd = whh_ref[...].astype(jnp.float32)        # block-diag (nd*H, nd*3H)
    bhh = bhh_ref[...].astype(jnp.float32)           # (1, nd*3H)

    def step(t, h_cat):
        # One MXU push per timestep for BOTH directions (block-diag W_hh).
        gh_all = jnp.dot(h_cat, whh_bd,
                         preferred_element_type=jnp.float32) + bhh
        h_new = []
        for d in range(nd):
            td = t if d == 0 else (T - 1) - t        # reversed time for dir 1
            gi = gi_ref[td, :, d * 3 * H:(d + 1) * 3 * H]
            gh = gh_all[:, d * 3 * H:(d + 1) * 3 * H]
            h_d = h_cat[:, d * H:(d + 1) * H]
            # One sigmoid over the contiguous r|z slab, then slice.
            rz = jax.nn.sigmoid(gi[:, :2 * H] + gh[:, :2 * H])
            r = rz[:, :H]
            z = rz[:, H:2 * H]
            n = jnp.tanh(gi[:, 2 * H:] + r * gh[:, 2 * H:])
            h_nd = (1.0 - z) * n + z * h_d
            # Direction d writes its lane slab of the single output block.
            out_ref[td, :, d * H:(d + 1) * H] = h_nd.astype(out_ref.dtype)
            h_new.append(h_nd)
        return h_new[0] if nd == 1 else jnp.concatenate(h_new, axis=-1)

    h0 = jnp.zeros((B, nd * H), jnp.float32)
    jax.lax.fori_loop(0, T, step, h0, unroll=unroll)

    if fuse_fc:
        # Fused FC head: single batched matmul over the whole (VMEM-resident)
        # hidden sequence instead of T tiny per-step dots.
        O = out_fc_ref.shape[2]
        hid = out_ref[...].astype(jnp.float32).reshape(T * B, nd * H)
        fc = (jnp.dot(hid, wfc_ref[...].astype(jnp.float32),
                      preferred_element_type=jnp.float32)
              + bfc_ref[...].astype(jnp.float32))
        out_fc_ref[...] = fc.reshape(T, B, O).astype(out_fc_ref.dtype)


# ----------------------------------------------------------------------------
# Pallas wrapper
# ----------------------------------------------------------------------------
def gru_layer_pallas(x_tbd, layer_params, hidden_dim, num_dirs,
                     fc_params=None, output_dim=None, unroll=8):
    """One GRU layer (all directions, all timesteps) in a single pallas_call.

    x_tbd       : (T, B, Din) layer input, time-major.
    layer_params: dict with 'w_ih_cat' (Din, nd*3H), 'b_ih_cat' (1, nd*3H),
                  'w_hh_bd' (nd*H, nd*3H), 'b_hh_cat' (1, nd*3H).
    fc_params   : optional ((nd*H, O) W_fc^T, (1, O) bias); when given the FC
                  head is fused and its (T,B,O) output returned as well.
    Returns (hidden (T,B,nd*H), fc_out or None).
    """
    T, B, _ = x_tbd.shape
    H = hidden_dim
    fuse_fc = fc_params is not None

    inputs = [x_tbd,
              layer_params["w_ih_cat"], layer_params["b_ih_cat"],
              layer_params["w_hh_bd"], layer_params["b_hh_cat"]]
    out_shapes = [jax.ShapeDtypeStruct((T, B, num_dirs * H), jnp.float32)]
    if fuse_fc:
        w_fc_t, b_fc = fc_params
        inputs += [w_fc_t, b_fc]
        out_shapes.append(jax.ShapeDtypeStruct((T, B, output_dim), jnp.float32))

    kernel = functools.partial(
        _gru_layer_kernel, seq_len=T, hidden_dim=H, num_dirs=num_dirs,
        fuse_fc=fuse_fc, unroll=min(T, unroll))

    outs = pl.pallas_call(
        kernel,
        out_shape=tuple(out_shapes),
        scratch_shapes=[pltpu.VMEM((T, B, num_dirs * 3 * H), jnp.float32)],
        compiler_params=pltpu.CompilerParams(
            vmem_limit_bytes=_vmem_limit_bytes()),
    )(*inputs)

    if fuse_fc:
        return outs[0], outs[1]
    return outs[0], None


# ----------------------------------------------------------------------------
# Model: parameters + forward
# ----------------------------------------------------------------------------
class GRUModelPallas:
    def __init__(self, input_dim, hidden_dim, output_dim, dropout, layers,
                 bidirectional_flag, key):
        self.input_dim = input_dim
        self.hidden_dim = hidden_dim
        self.output_dim = output_dim
        self.num_layers = layers
        self.bidirectional_used = bidirectional_flag
        self.num_dirs = 2 if bidirectional_flag else 1
        # dropout exists on the torch module but is never applied in forward().

        H = hidden_dim
        nd = self.num_dirs
        bound = 1.0 / math.sqrt(H)
        self.rnn_params = []
        for layer in range(layers):
            in_size = input_dim if layer == 0 else H * nd
            dirs = []
            for _ in range(nd):
                key, k1, k2, k3, k4 = jax.random.split(key, 5)
                w_ih = jax.random.uniform(k1, (3 * H, in_size), jnp.float32,
                                          -bound, bound)
                w_hh = jax.random.uniform(k2, (3 * H, H), jnp.float32,
                                          -bound, bound)
                b_ih = jax.random.uniform(k3, (3 * H,), jnp.float32, -bound, bound)
                b_hh = jax.random.uniform(k4, (3 * H,), jnp.float32, -bound, bound)
                dirs.append(dict(
                    w_ih_t=jnp.transpose(w_ih),      # (in_size, 3H)
                    w_hh_t=jnp.transpose(w_hh),      # (H, 3H)
                    b_ih=b_ih.reshape(1, 3 * H),
                    b_hh=b_hh.reshape(1, 3 * H),
                ))
            # Pre-packed operands for the fused kernel:
            #  * concatenated input-projection weight (single batched matmul),
            #  * block-diagonal recurrent weight (one MXU push per step for
            #    both directions).
            w_ih_cat = jnp.concatenate([d["w_ih_t"] for d in dirs], axis=1)
            b_ih_cat = jnp.concatenate([d["b_ih"] for d in dirs], axis=1)
            b_hh_cat = jnp.concatenate([d["b_hh"] for d in dirs], axis=1)
            w_hh_bd = jnp.zeros((nd * H, nd * 3 * H), jnp.float32)
            for d in range(nd):
                w_hh_bd = w_hh_bd.at[d * H:(d + 1) * H,
                                     d * 3 * H:(d + 1) * 3 * H].set(dirs[d]["w_hh_t"])
            self.rnn_params.append(dict(
                dirs=dirs,
                w_ih_cat=w_ih_cat, b_ih_cat=b_ih_cat,
                w_hh_bd=w_hh_bd, b_hh_cat=b_hh_cat,
            ))

        fc_in = nd * H
        fc_bound = 1.0 / math.sqrt(fc_in)
        key, kf1, kf2 = jax.random.split(key, 3)
        w_fc = jax.random.uniform(kf1, (output_dim, fc_in), jnp.float32,
                                  -fc_bound, fc_bound)
        b_fc = jax.random.uniform(kf2, (output_dim,), jnp.float32,
                                  -fc_bound, fc_bound)
        self.w_fc_t = jnp.transpose(w_fc)            # (fc_in, output_dim)
        self.b_fc = b_fc.reshape(1, output_dim)

    def __call__(self, x):
        """x: (B, T, input_dim) -> (output (B,T,dirs*H), out (B,T,output_dim))."""
        h = jnp.transpose(x, (1, 0, 2))              # time-major (T, B, D)
        out_fc_tbd = None
        for layer in range(self.num_layers):
            last = layer == self.num_layers - 1
            fc_params = (self.w_fc_t, self.b_fc) if last else None
            h, fc = gru_layer_pallas(h, self.rnn_params[layer],
                                     self.hidden_dim, self.num_dirs,
                                     fc_params=fc_params,
                                     output_dim=self.output_dim)
            if last:
                out_fc_tbd = fc
        output = jnp.transpose(h, (1, 0, 2))          # (B, T, dirs*H)
        out = jnp.transpose(out_fc_tbd, (1, 0, 2))    # (B, T, output_dim)
        return output, out


# ----------------------------------------------------------------------------
# Pure-JAX reference (lax.scan) for correctness check
# ----------------------------------------------------------------------------
def _gru_layer_ref(x_tbd, p):
    H = p["w_hh_t"].shape[0]

    def step(hprev, xt):
        gi = xt @ p["w_ih_t"] + p["b_ih"]
        gh = hprev @ p["w_hh_t"] + p["b_hh"]
        r = jax.nn.sigmoid(gi[:, :H] + gh[:, :H])
        z = jax.nn.sigmoid(gi[:, H:2 * H] + gh[:, H:2 * H])
        n = jnp.tanh(gi[:, 2 * H:] + r * gh[:, 2 * H:])
        hnew = (1.0 - z) * n + z * hprev
        return hnew, hnew

    h0 = jnp.zeros((x_tbd.shape[1], H), jnp.float32)
    _, ys = jax.lax.scan(step, h0, x_tbd)
    return ys


def _forward_ref(model, x):
    h = jnp.transpose(x, (1, 0, 2))
    for layer in range(model.num_layers):
        dirs = model.rnn_params[layer]["dirs"]
        out_f = _gru_layer_ref(h, dirs[0])
        if model.bidirectional_used:
            out_b = jnp.flip(_gru_layer_ref(jnp.flip(h, axis=0), dirs[1]), axis=0)
            h = jnp.concatenate([out_f, out_b], axis=-1)
        else:
            h = out_f
    out = h @ model.w_fc_t + model.b_fc
    return jnp.transpose(h, (1, 0, 2)), jnp.transpose(out, (1, 0, 2))


# ----------------------------------------------------------------------------
if __name__ == "__main__":
    B, T = 2, 8
    input_dim, hidden_dim, output_dim = 16, 32, 4
    layers, bidirectional = 2, True

    key = jax.random.PRNGKey(0)
    key_params, key_x, key_params2 = jax.random.split(key, 3)

    model = GRUModelPallas(input_dim, hidden_dim, output_dim,
                           dropout=0.1, layers=layers,
                           bidirectional_flag=bidirectional, key=key_params)

    x = jax.random.normal(key_x, (B, T, input_dim), jnp.float32)

    output, out = model(x)
    output = jax.block_until_ready(output)
    out = jax.block_until_ready(out)

    assert output.shape == (B, T, 2 * hidden_dim)
    assert out.shape == (B, T, output_dim)

    ref_output, ref_out = _forward_ref(model, x)
    assert jnp.allclose(output, ref_output, atol=5e-3, rtol=5e-3)
    assert jnp.allclose(out, ref_out, atol=5e-3, rtol=5e-3)

    # Also exercise the unidirectional, single-layer kernel configuration.
    model_uni = GRUModelPallas(input_dim, hidden_dim, output_dim,
                               dropout=0.0, layers=1,
                               bidirectional_flag=False, key=key_params2)
    output_u, out_u = model_uni(x)
    output_u = jax.block_until_ready(output_u)
    out_u = jax.block_until_ready(out_u)
    ref_output_u, ref_out_u = _forward_ref(model_uni, x)
    assert output_u.shape == (B, T, hidden_dim)
    assert out_u.shape == (B, T, output_dim)
    assert jnp.allclose(output_u, ref_output_u, atol=5e-3, rtol=5e-3)
    assert jnp.allclose(out_u, ref_out_u, atol=5e-3, rtol=5e-3)

    print("KERNEL_OK")
</pallas_src>

<mosaic_0001>
module attributes {stable_mosaic.version = 11 : i64} {
  func.func @_gru_layer_kernel(%arg0: memref<8x2x16xf32, #tpu.memory_space<vmem>>, %arg1: memref<16x192xf32, #tpu.memory_space<vmem>>, %arg2: memref<1x192xf32, #tpu.memory_space<vmem>>, %arg3: memref<64x192xf32, #tpu.memory_space<vmem>>, %arg4: memref<1x192xf32, #tpu.memory_space<vmem>>, %arg5: memref<8x2x64xf32, #tpu.memory_space<vmem>>, %arg6: memref<8x2x192xf32, #tpu.memory_space<vmem>>) attributes {dimension_semantics = [], scalar_prefetch = 0 : i64, scratch_operands = 1 : i64, tpu.core_type = #tpu.core_type<tc>} {
    %c0 = arith.constant 0 : index
    %c0_0 = arith.constant 0 : index
    %c0_1 = arith.constant 0 : index
    %0 = vector.load %arg0[%c0, %c0_0, %c0_1] : memref<8x2x16xf32, #tpu.memory_space<vmem>>, vector<8x2x16xf32>
    %1 = vector.shape_cast %0 : vector<8x2x16xf32> to vector<16x16xf32>
    %c0_2 = arith.constant 0 : index
    %c0_3 = arith.constant 0 : index
    %2 = vector.load %arg1[%c0_2, %c0_3] : memref<16x192xf32, #tpu.memory_space<vmem>>, vector<16x192xf32>
    %cst = arith.constant dense<0.000000e+00> : vector<16x192xf32>
    %3 = tpu.matmul %1, %2, %cst {dimension_numbers = #tpu.dot_dimension_numbers<[1], [0], [0], [1], [0, 0, 1, 1], [], []>} : vector<16x16xf32>, vector<16x192xf32>, vector<16x192xf32> -> vector<16x192xf32>
    %c0_4 = arith.constant 0 : index
    %c0_5 = arith.constant 0 : index
    %4 = vector.load %arg2[%c0_4, %c0_5] : memref<1x192xf32, #tpu.memory_space<vmem>>, vector<1x192xf32>
    %5 = vector.broadcast %4 : vector<1x192xf32> to vector<16x192xf32>
    %6 = arith.addf %3, %5 : vector<16x192xf32>
    %7 = vector.shape_cast %6 : vector<16x192xf32> to vector<8x2x192xf32>
    %c0_6 = arith.constant 0 : index
    %c0_7 = arith.constant 0 : index
    %c0_8 = arith.constant 0 : index
    %8 = vector.load %arg6[%c0_6, %c0_7, %c0_8] : memref<8x2x192xf32, #tpu.memory_space<vmem>>, vector<8x2x192xf32>
    tpu.vector_store %arg6[%c0_6, %c0_7, %c0_8], %7 {strides = array<i32>} : memref<8x2x192xf32, #tpu.memory_space<vmem>>, vector<8x2x192xf32>,
    %c0_9 = arith.constant 0 : index
    %c0_10 = arith.constant 0 : index
    %9 = vector.load %arg3[%c0_9, %c0_10] : memref<64x192xf32, #tpu.memory_space<vmem>>, vector<64x192xf32>
    %c0_11 = arith.constant 0 : index
    %c0_12 = arith.constant 0 : index
    %10 = vector.load %arg4[%c0_11, %c0_12] : memref<1x192xf32, #tpu.memory_space<vmem>>, vector<1x192xf32>
    %cst_13 = arith.constant 0.000000e+00 : f32
    %11 = vector.broadcast %cst_13 : f32 to vector<2x64xf32>
    %c0_i32 = arith.constant 0 : i32
    %cst_14 = arith.constant dense<0.000000e+00> : vector<2x192xf32>
    %12 = tpu.matmul %11, %9, %cst_14 {dimension_numbers = #tpu.dot_dimension_numbers<[1], [0], [0], [1], [0, 0, 1, 1], [], []>} : vector<2x64xf32>, vector<64x192xf32>, vector<2x192xf32> -> vector<2x192xf32>
    %13 = vector.broadcast %10 : vector<1x192xf32> to vector<2x192xf32>
    %14 = arith.addf %12, %13 : vector<2x192xf32>
    %15 = arith.index_cast %c0_i32 : i32 to index
    %c0_15 = arith.constant 0 : index
    %c0_16 = arith.constant 0 : index
    %16 = vector.load %arg6[%15, %c0_15, %c0_16] : memref<8x2x192xf32, #tpu.memory_space<vmem>>, vector<1x2x96xf32>
    %17 = vector.shape_cast %16 : vector<1x2x96xf32> to vector<2x96xf32>
    %18 = vector.extract_strided_slice %14 {offsets = [0, 0], sizes = [2, 96], strides = [1, 1]} : vector<2x192xf32> to vector<2x96xf32>
    %19 = vector.extract_strided_slice %11 {offsets = [0, 0], sizes = [2, 32], strides = [1, 1]} : vector<2x64xf32> to vector<2x32xf32>
    %20 = vector.extract_strided_slice %17 {offsets = [0, 0], sizes = [2, 64], strides = [1, 1]} : vector<2x96xf32> to vector<2x64xf32>
    %21 = vector.extract_strided_slice %18 {offsets = [0, 0], sizes = [2, 64], strides = [1, 1]} : vector<2x96xf32> to vector<2x64xf32>
    %22 = arith.addf %20, %21 : vector<2x64xf32>
    %23 = arith.negf %22 : vector<2x64xf32>
    %24 = math.exp %23 : vector<2x64xf32>
    %cst_17 = arith.constant 1.000000e+00 : f32
    %25 = vector.broadcast %cst_17 : f32 to vector<2x64xf32>
    %26 = arith.addf %25, %24 : vector<2x64xf32>
    %27 = arith.divf %25, %26 : vector<2x64xf32>
    %28 = vector.extract_strided_slice %27 {offsets = [0, 0], sizes = [2, 32], strides = [1, 1]} : vector<2x64xf32> to vector<2x32xf32>
    %29 = vector.extract_strided_slice %27 {offsets = [0, 32], sizes = [2, 32], strides = [1, 1]} : vector<2x64xf32> to vector<2x32xf32>
    %30 = vector.extract_strided_slice %17 {offsets = [0, 64], sizes = [2, 32], strides = [1, 1]} : vector<2x96xf32> to vector<2x32xf32>
    %31 = vector.extract_strided_slice %18 {offsets = [0, 64], sizes = [2, 32], strides = [1, 1]} : vector<2x96xf32> to vector<2x32xf32>
    %32 = arith.mulf %28, %31 : vector<2x32xf32>
    %33 = arith.addf %30, %32 : vector<2x32xf32>
    %34 = math.tanh %33 : vector<2x32xf32>
    %cst_18 = arith.constant 1.000000e+00 : f32
    %35 = vector.broadcast %cst_18 : f32 to vector<2x32xf32>
    %36 = arith.subf %35, %29 : vector<2x32xf32>
    %37 = arith.mulf %36, %34 : vector<2x32xf32>
    %38 = arith.mulf %29, %19 : vector<2x32xf32>
    %39 = arith.addf %37, %38 : vector<2x32xf32>
    %40 = arith.index_cast %c0_i32 : i32 to index
    %c0_19 = arith.constant 0 : index
    %c0_20 = arith.constant 0 : index
    %41 = vector.load %arg5[%40, %c0_19, %c0_20] : memref<8x2x64xf32, #tpu.memory_space<vmem>>, vector<1x2x32xf32>
    %42 = vector.shape_cast %41 : vector<1x2x32xf32> to vector<2x32xf32>
    %43 = vector.shape_cast %39 : vector<2x32xf32> to vector<1x2x32xf32>
    tpu.vector_store %arg5[%40, %c0_19, %c0_20], %43 {strides = array<i32>} : memref<8x2x64xf32, #tpu.memory_space<vmem>>, vector<1x2x32xf32>,
    %c7_i32 = arith.constant 7 : i32
    %44 = arith.subi %c7_i32, %c0_i32 : i32
    %45 = arith.index_cast %44 : i32 to index
    %c0_21 = arith.constant 0 : index
    %c96 = arith.constant 96 : index
    %46 = vector.load %arg6[%45, %c0_21, %c96] : memref<8x2x192xf32, #tpu.memory_space<vmem>>, vector<1x2x96xf32>
    %47 = vector.shape_cast %46 : vector<1x2x96xf32> to vector<2x96xf32>
    %48 = vector.extract_strided_slice %14 {offsets = [0, 96], sizes = [2, 96], strides = [1, 1]} : vector<2x192xf32> to vector<2x96xf32>
    %49 = vector.extract_strided_slice %11 {offsets = [0, 32], sizes = [2, 32], strides = [1, 1]} : vector<2x64xf32> to vector<2x32xf32>
    %50 = vector.extract_strided_slice %47 {offsets = [0, 0], sizes = [2, 64], strides = [1, 1]} : vector<2x96xf32> to vector<2x64xf32>
    %51 = vector.extract_strided_slice %48 {offsets = [0, 0], sizes = [2, 64], strides = [1, 1]} : vector<2x96xf32> to vector<2x64xf32>
    %52 = arith.addf %50, %51 : vector<2x64xf32>
    %53 = arith.negf %52 : vector<2x64xf32>
    %54 = math.exp %53 : vector<2x64xf32>
    %cst_22 = arith.constant 1.000000e+00 : f32
    %55 = vector.broadcast %cst_22 : f32 to vector<2x64xf32>
    %56 = arith.addf %55, %54 : vector<2x64xf32>
    %57 = arith.divf %55, %56 : vector<2x64xf32>
    %58 = vector.extract_strided_slice %57 {offsets = [0, 0], sizes = [2, 32], strides = [1, 1]} : vector<2x64xf32> to vector<2x32xf32>
    %59 = vector.extract_strided_slice %57 {offsets = [0, 32], sizes = [2, 32], strides = [1, 1]} : vector<2x64xf32> to vector<2x32xf32>
    %60 = vector.extract_strided_slice %47 {offsets = [0, 64], sizes = [2, 32], strides = [1, 1]} : vector<2x96xf32> to vector<2x32xf32>
    %61 = vector.extract_strided_slice %48 {offsets = [0, 64], sizes = [2, 32], strides = [1, 1]} : vector<2x96xf32> to vector<2x32xf32>
    %62 = arith.mulf %58, %61 : vector<2x32xf32>
    %63 = arith.addf %60, %62 : vector<2x32xf32>
    %64 = math.tanh %63 : vector<2x32xf32>
    %cst_23 = arith.constant 1.000000e+00 : f32
    %65 = vector.broadcast %cst_23 : f32 to vector<2x32xf32>
    %66 = arith.subf %65, %59 : vector<2x32xf32>
    %67 = arith.mulf %66, %64 : vector<2x32xf32>
    %68 = arith.mulf %59, %49 : vector<2x32xf32>
    %69 = arith.addf %67, %68 : vector<2x32xf32>
    %70 = arith.index_cast %44 : i32 to index
    %c0_24 = arith.constant 0 : index
    %c32 = arith.constant 32 : index
    %71 = vector.load %arg5[%70, %c0_24, %c32] : memref<8x2x64xf32, #tpu.memory_space<vmem>>, vector<1x2x32xf32>
    %72 = vector.shape_cast %71 : vector<1x2x32xf32> to vector<2x32xf32>
    %73 = vector.shape_cast %69 : vector<2x32xf32> to vector<1x2x32xf32>
    tpu.vector_store %arg5[%70, %c0_24, %c32], %73 {strides = array<i32>} : memref<8x2x64xf32, #tpu.memory_space<vmem>>, vector<1x2x32xf32>,
    %74 = tpu.concatenate %39, %69 in 1 : vector<2x32xf32>, vector<2x32xf32> -> vector<2x64xf32>
    %c1_i32 = arith.constant 1 : i32
    %cst_25 = arith.constant dense<0.000000e+00> : vector<2x192xf32>
    %75 = tpu.matmul %74, %9, %cst_25 {dimension_numbers = #tpu.dot_dimension_numbers<[1], [0], [0], [1], [0, 0, 1, 1], [], []>} : vector<2x64xf32>, vector<64x192xf32>, vector<2x192xf32> -> vector<2x192xf32>
    %76 = vector.broadcast %10 : vector<1x192xf32> to vector<2x192xf32>
    %77 = arith.addf %75, %76 : vector<2x192xf32>
    %78 = arith.index_cast %c1_i32 : i32 to index
    %c0_26 = arith.constant 0 : index
    %c0_27 = arith.constant 0 : index
    %79 = vector.load %arg6[%78, %c0_26, %c0_27] : memref<8x2x192xf32, #tpu.memory_space<vmem>>, vector<1x2x96xf32>
    %80 = vector.shape_cast %79 : vector<1x2x96xf32> to vector<2x96xf32>
    %81 = vector.extract_strided_slice %77 {offsets = [0, 0], sizes = [2, 96], strides = [1, 1]} : vector<2x192xf32> to vector<2x96xf32>
    %82 = vector.extract_strided_slice %74 {offsets = [0, 0], sizes = [2, 32], strides = [1, 1]} : vector<2x64xf32> to vector<2x32xf32>
    %83 = vector.extract_strided_slice %80 {offsets = [0, 0], sizes = [2, 64], strides = [1, 1]} : vector<2x96xf32> to vector<2x64xf32>
    %84 = vector.extract_strided_slice %81 {offsets = [0, 0], sizes = [2, 64], strides = [1, 1]} : vector<2x96xf32> to vector<2x64xf32>
    %85 = arith.addf %83, %84 : vector<2x64xf32>
    %86 = arith.negf %85 : vector<2x64xf32>
    %87 = math.exp %86 : vector<2x64xf32>
    %cst_28 = arith.constant 1.000000e+00 : f32
    %88 = vector.broadcast %cst_28 : f32 to vector<2x64xf32>
    %89 = arith.addf %88, %87 : vector<2x64xf32>
    %90 = arith.divf %88, %89 : vector<2x64xf32>
    %91 = vector.extract_strided_slice %90 {offsets = [0, 0], sizes = [2, 32], strides = [1, 1]} : vector<2x64xf32> to vector<2x32xf32>
    %92 = vector.extract_strided_slice %90 {offsets = [0, 32], sizes = [2, 32], strides = [1, 1]} : vector<2x64xf32> to vector<2x32xf32>
    %93 = vector.extract_strided_slice %80 {offsets = [0, 64], sizes = [2, 32], strides = [1, 1]} : vector<2x96xf32> to vector<2x32xf32>
    %94 = vector.extract_strided_slice %81 {offsets = [0, 64], sizes = [2, 32], strides = [1, 1]} : vector<2x96xf32> to vector<2x32xf32>
    %95 = arith.mulf %91, %94 : vector<2x32xf32>
    %96 = arith.addf %93, %95 : vector<2x32xf32>
    %97 = math.tanh %96 : vector<2x32xf32>
    %cst_29 = arith.constant 1.000000e+00 : f32
    %98 = vector.broadcast %cst_29 : f32 to vector<2x32xf32>
    %99 = arith.subf %98, %92 : vector<2x32xf32>
    %100 = arith.mulf %99, %97 : vector<2x32xf32>
    %101 = arith.mulf %92, %82 : vector<2x32xf32>
    %102 = arith.addf %100, %101 : vector<2x32xf32>
    %103 = arith.index_cast %c1_i32 : i32 to index
    %c0_30 = arith.constant 0 : index
    %c0_31 = arith.constant 0 : index
    %104 = vector.load %arg5[%103, %c0_30, %c0_31] : memref<8x2x64xf32, #tpu.memory_space<vmem>>, vector<1x2x32xf32>
    %105 = vector.shape_cast %104 : vector<1x2x32xf32> to vector<2x32xf32>
    %106 = vector.shape_cast %102 : vector<2x32xf32> to vector<1x2x32xf32>
    tpu.vector_store %arg5[%103, %c0_30, %c0_31], %106 {strides = array<i32>} : memref<8x2x64xf32, #tpu.memory_space<vmem>>, vector<1x2x32xf32>,
    %c7_i32_32 = arith.constant 7 : i32
    %107 = arith.subi %c7_i32_32, %c1_i32 : i32
    %108 = arith.index_cast %107 : i32 to index
    %c0_33 = arith.constant 0 : index
    %c96_34 = arith.constant 96 : index
    %109 = vector.load %arg6[%108, %c0_33, %c96_34] : memref<8x2x192xf32, #tpu.memory_space<vmem>>, vector<1x2x96xf32>
    %110 = vector.shape_cast %109 : vector<1x2x96xf32> to vector<2x96xf32>
    %111 = vector.extract_strided_slice %77 {offsets = [0, 96], sizes = [2, 96], strides = [1, 1]} : vector<2x192xf32> to vector<2x96xf32>
    %112 = vector.extract_strided_slice %74 {offsets = [0, 32], sizes = [2, 32], strides = [1, 1]} : vector<2x64xf32> to vector<2x32xf32>
    %113 = vector.extract_strided_slice %110 {offsets = [0, 0], sizes = [2, 64], strides = [1, 1]} : vector<2x96xf32> to vector<2x64xf32>
    %114 = vector.extract_strided_slice %111 {offsets = [0, 0], sizes = [2, 64], strides = [1, 1]} : vector<2x96xf32> to vector<2x64xf32>
    %115 = arith.addf %113, %114 : vector<2x64xf32>
    %116 = arith.negf %115 : vector<2x64xf32>
    %117 = math.exp %116 : vector<2x64xf32>
    %cst_35 = arith.constant 1.000000e+00 : f32
    %118 = vector.broadcast %cst_35 : f32 to vector<2x64xf32>
    %119 = arith.addf %118, %117 : vector<2x64xf32>
    %120 = arith.divf %118, %119 : vector<2x64xf32>
    %121 = vector.extract_strided_slice %120 {offsets = [0, 0], sizes = [2, 32], strides = [1, 1]} : vector<2x64xf32> to vector<2x32xf32>
    %122 = vector.extract_strided_slice %120 {offsets = [0, 32], sizes = [2, 32], strides = [1, 1]} : vector<2x64xf32> to vector<2x32xf32>
    %123 = vector.extract_strided_slice %110 {offsets = [0, 64], sizes = [2, 32], strides = [1, 1]} : vector<2x96xf32> to vector<2x32xf32>
    %124 = vector.extract_strided_slice %111 {offsets = [0, 64], sizes = [2, 32], strides = [1, 1]} : vector<2x96xf32> to vector<2x32xf32>
    %125 = arith.mulf %121, %124 : vector<2x32xf32>
    %126 = arith.addf %123, %125 : vector<2x32xf32>
    %127 = math.tanh %126 : vector<2x32xf32>
    %cst_36 = arith.constant 1.000000e+00 : f32
    %128 = vector.broadcast %cst_36 : f32 to vector<2x32xf32>
    %129 = arith.subf %128, %122 : vector<2x32xf32>
    %130 = arith.mulf %129, %127 : vector<2x32xf32>
    %131 = arith.mulf %122, %112 : vector<2x32xf32>
    %132 = arith.addf %130, %131 : vector<2x32xf32>
    %133 = arith.index_cast %107 : i32 to index
    %c0_37 = arith.constant 0 : index
    %c32_38 = arith.constant 32 : index
    %134 = vector.load %arg5[%133, %c0_37, %c32_38] : memref<8x2x64xf32, #tpu.memory_space<vmem>>, vector<1x2x32xf32>
    %135 = vector.shape_cast %134 : vector<1x2x32xf32> to vector<2x32xf32>
    %136 = vector.shape_cast %132 : vector<2x32xf32> to vector<1x2x32xf32>
    tpu.vector_store %arg5[%133, %c0_37, %c32_38], %136 {strides = array<i32>} : memref<8x2x64xf32, #tpu.memory_space<vmem>>, vector<1x2x32xf32>,
    %137 = tpu.concatenate %102, %132 in 1 : vector<2x32xf32>, vector<2x32xf32> -> vector<2x64xf32>
    %c2_i32 = arith.constant 2 : i32
    %cst_39 = arith.constant dense<0.000000e+00> : vector<2x192xf32>
    %138 = tpu.matmul %137, %9, %cst_39 {dimension_numbers = #tpu.dot_dimension_numbers<[1], [0], [0], [1], [0, 0, 1, 1], [], []>} : vector<2x64xf32>, vector<64x192xf32>, vector<2x192xf32> -> vector<2x192xf32>
    %139 = vector.broadcast %10 : vector<1x192xf32> to vector<2x192xf32>
    %140 = arith.addf %138, %139 : vector<2x192xf32>
    %141 = arith.index_cast %c2_i32 : i32 to index
    %c0_40 = arith.constant 0 : index
    %c0_41 = arith.constant 0 : index
    %142 = vector.load %arg6[%141, %c0_40, %c0_41] : memref<8x2x192xf32, #tpu.memory_space<vmem>>, vector<1x2x96xf32>
    %143 = vector.shape_cast %142 : vector<1x2x96xf32> to vector<2x96xf32>
    %144 = vector.extract_strided_slice %140 {offsets = [0, 0], sizes = [2, 96], strides = [1, 1]} : vector<2x192xf32> to vector<2x96xf32>
    %145 = vector.extract_strided_slice %137 {offsets = [0, 0], sizes = [2, 32], strides = [1, 1]} : vector<2x64xf32> to vector<2x32xf32>
    %146 = vector.extract_strided_slice %143 {offsets = [0, 0], sizes = [2, 64], strides = [1, 1]} : vector<2x96xf32> to vector<2x64xf32>
    %147 = vector.extract_strided_slice %144 {offsets = [0, 0], sizes = [2, 64], strides = [1, 1]} : vector<2x96xf32> to vector<2x64xf32>
    %148 = arith.addf %146, %147 : vector<2x64xf32>
    %149 = arith.negf %148 : vector<2x64xf32>
    %150 = math.exp %149 : vector<2x64xf32>
    %cst_42 = arith.constant 1.000000e+00 : f32
    %151 = vector.broadcast %cst_42 : f32 to vector<2x64xf32>
    %152 = arith.addf %151, %150 : vector<2x64xf32>
    %153 = arith.divf %151, %152 : vector<2x64xf32>
    %154 = vector.extract_strided_slice %153 {offsets = [0, 0], sizes = [2, 32], strides = [1, 1]} : vector<2x64xf32> to vector<2x32xf32>
    %155 = vector.extract_strided_slice %153 {offsets = [0, 32], sizes = [2, 32], strides = [1, 1]} : vector<2x64xf32> to vector<2x32xf32>
    %156 = vector.extract_strided_slice %143 {offsets = [0, 64], sizes = [2, 32], strides = [1, 1]} : vector<2x96xf32> to vector<2x32xf32>
    %157 = vector.extract_strided_slice %144 {offsets = [0, 64], sizes = [2, 32], strides = [1, 1]} : vector<2x96xf32> to vector<2x32xf32>
    %158 = arith.mulf %154, %157 : vector<2x32xf32>
    %159 = arith.addf %156, %158 : vector<2x32xf32>
    %160 = math.tanh %159 : vector<2x32xf32>
    %cst_43 = arith.constant 1.000000e+00 : f32
    %161 = vector.broadcast %cst_43 : f32 to vector<2x32xf32>
    %162 = arith.subf %161, %155 : vector<2x32xf32>
    %163 = arith.mulf %162, %160 : vector<2x32xf32>
    %164 = arith.mulf %155, %145 : vector<2x32xf32>
    %165 = arith.addf %163, %164 : vector<2x32xf32>
    %166 = arith.index_cast %c2_i32 : i32 to index
    %c0_44 = arith.constant 0 : index
    %c0_45 = arith.constant 0 : index
    %167 = vector.load %arg5[%166, %c0_44, %c0_45] : memref<8x2x64xf32, #tpu.memory_space<vmem>>, vector<1x2x32xf32>
    %168 = vector.shape_cast %167 : vector<1x2x32xf32> to vector<2x32xf32>
    %169 = vector.shape_cast %165 : vector<2x32xf32> to vector<1x2x32xf32>
    tpu.vector_store %arg5[%166, %c0_44, %c0_45], %169 {strides = array<i32>} : memref<8x2x64xf32, #tpu.memory_space<vmem>>, vector<1x2x32xf32>,
    %c7_i32_46 = arith.constant 7 : i32
    %170 = arith.subi %c7_i32_46, %c2_i32 : i32
    %171 = arith.index_cast %170 : i32 to index
    %c0_47 = arith.constant 0 : index
    %c96_48 = arith.constant 96 : index
    %172 = vector.load %arg6[%171, %c0_47, %c96_48] : memref<8x2x192xf32, #tpu.memory_space<vmem>>, vector<1x2x96xf32>
    %173 = vector.shape_cast %172 : vector<1x2x96xf32> to vector<2x96xf32>
    %174 = vector.extract_strided_slice %140 {offsets = [0, 96], sizes = [2, 96], strides = [1, 1]} : vector<2x192xf32> to vector<2x96xf32>
    %175 = vector.extract_strided_slice %137 {offsets = [0, 32], sizes = [2, 32], strides = [1, 1]} : vector<2x64xf32> to vector<2x32xf32>
    %176 = vector.extract_strided_slice %173 {offsets = [0, 0], sizes = [2, 64], strides = [1, 1]} : vector<2x96xf32> to vector<2x64xf32>
    %177 = vector.extract_strided_slice %174 {offsets = [0, 0], sizes = [2, 64], strides = [1, 1]} : vector<2x96xf32> to vector<2x64xf32>
    %178 = arith.addf %176, %177 : vector<2x64xf32>
    %179 = arith.negf %178 : vector<2x64xf32>
    %180 = math.exp %179 : vector<2x64xf32>
    %cst_49 = arith.constant 1.000000e+00 : f32
    %181 = vector.broadcast %cst_49 : f32 to vector<2x64xf32>
    %182 = arith.addf %181, %180 : vector<2x64xf32>
    %183 = arith.divf %181, %182 : vector<2x64xf32>
    %184 = vector.extract_strided_slice %183 {offsets = [0, 0], sizes = [2, 32], strides = [1, 1]} : vector<2x64xf32> to vector<2x32xf32>
    %185 = vector.extract_strided_slice %183 {offsets = [0, 32], sizes = [2, 32], strides = [1, 1]} : vector<2x64xf32> to vector<2x32xf32>
    %186 = vector.extract_strided_slice %173 {offsets = [0, 64], sizes = [2, 32], strides = [1, 1]} : vector<2x96xf32> to vector<2x32xf32>
    %187 = vector.extract_strided_slice %174 {offsets = [0, 64], sizes = [2, 32], strides = [1, 1]} : vector<2x96xf32> to vector<2x32xf32>
    %188 = arith.mulf %184, %187 : vector<2x32xf32>
    %189 = arith.addf %186, %188 : vector<2x32xf32>
    %190 = math.tanh %189 : vector<2x32xf32>
    %cst_50 = arith.constant 1.000000e+00 : f32
    %191 = vector.broadcast %cst_50 : f32 to vector<2x32xf32>
    %192 = arith.subf %191, %185 : vector<2x32xf32>
    %193 = arith.mulf %192, %190 : vector<2x32xf32>
    %194 = arith.mulf %185, %175 : vector<2x32xf32>
    %195 = arith.addf %193, %194 : vector<2x32xf32>
    %196 = arith.index_cast %170 : i32 to index
    %c0_51 = arith.constant 0 : index
    %c32_52 = arith.constant 32 : index
    %197 = vector.load %arg5[%196, %c0_51, %c32_52] : memref<8x2x64xf32, #tpu.memory_space<vmem>>, vector<1x2x32xf32>
    %198 = vector.shape_cast %197 : vector<1x2x32xf32> to vector<2x32xf32>
    %199 = vector.shape_cast %195 : vector<2x32xf32> to vector<1x2x32xf32>
    tpu.vector_store %arg5[%196, %c0_51, %c32_52], %199 {strides = array<i32>} : memref<8x2x64xf32, #tpu.memory_space<vmem>>, vector<1x2x32xf32>,
    %200 = tpu.concatenate %165, %195 in 1 : vector<2x32xf32>, vector<2x32xf32> -> vector<2x64xf32>
    %c3_i32 = arith.constant 3 : i32
    %cst_53 = arith.constant dense<0.000000e+00> : vector<2x192xf32>
    %201 = tpu.matmul %200, %9, %cst_53 {dimension_numbers = #tpu.dot_dimension_numbers<[1], [0], [0], [1], [0, 0, 1, 1], [], []>} : vector<2x64xf32>, vector<64x192xf32>, vector<2x192xf32> -> vector<2x192xf32>
    %202 = vector.broadcast %10 : vector<1x192xf32> to vector<2x192xf32>
    %203 = arith.addf %201, %202 : vector<2x192xf32>
    %204 = arith.index_cast %c3_i32 : i32 to index
    %c0_54 = arith.constant 0 : index
    %c0_55 = arith.constant 0 : index
    %205 = vector.load %arg6[%204, %c0_54, %c0_55] : memref<8x2x192xf32, #tpu.memory_space<vmem>>, vector<1x2x96xf32>
    %206 = vector.shape_cast %205 : vector<1x2x96xf32> to vector<2x96xf32>
    %207 = vector.extract_strided_slice %203 {offsets = [0, 0], sizes = [2, 96], strides = [1, 1]} : vector<2x192xf32> to vector<2x96xf32>
    %208 = vector.extract_strided_slice %200 {offsets = [0, 0], sizes = [2, 32], strides = [1, 1]} : vector<2x64xf32> to vector<2x32xf32>
    %209 = vector.extract_strided_slice %206 {offsets = [0, 0], sizes = [2, 64], strides = [1, 1]} : vector<2x96xf32> to vector<2x64xf32>
    %210 = vector.extract_strided_slice %207 {offsets = [0, 0], sizes = [2, 64], strides = [1, 1]} : vector<2x96xf32> to vector<2x64xf32>
    %211 = arith.addf %209, %210 : vector<2x64xf32>
    %212 = arith.negf %211 : vector<2x64xf32>
    %213 = math.exp %212 : vector<2x64xf32>
    %cst_56 = arith.constant 1.000000e+00 : f32
    %214 = vector.broadcast %cst_56 : f32 to vector<2x64xf32>
    %215 = arith.addf %214, %213 : vector<2x64xf32>
    %216 = arith.divf %214, %215 : vector<2x64xf32>
    %217 = vector.extract_strided_slice %216 {offsets = [0, 0], sizes = [2, 32], strides = [1, 1]} : vector<2x64xf32> to vector<2x32xf32>
    %218 = vector.extract_strided_slice %216 {offsets = [0, 32], sizes = [2, 32], strides = [1, 1]} : vector<2x64xf32> to vector<2x32xf32>
    %219 = vector.extract_strided_slice %206 {offsets = [0, 64], sizes = [2, 32], strides = [1, 1]} : vector<2x96xf32> to vector<2x32xf32>
    %220 = vector.extract_strided_slice %207 {offsets = [0, 64], sizes = [2, 32], strides = [1, 1]} : vector<2x96xf32> to vector<2x32xf32>
    %221 = arith.mulf %217, %220 : vector<2x32xf32>
    %222 = arith.addf %219, %221 : vector<2x32xf32>
    %223 = math.tanh %222 : vector<2x32xf32>
    %cst_57 = arith.constant 1.000000e+00 : f32
    %224 = vector.broadcast %cst_57 : f32 to vector<2x32xf32>
    %225 = arith.subf %224, %218 : vector<2x32xf32>
    %226 = arith.mulf %225, %223 : vector<2x32xf32>
    %227 = arith.mulf %218, %208 : vector<2x32xf32>
    %228 = arith.addf %226, %227 : vector<2x32xf32>
    %229 = arith.index_cast %c3_i32 : i32 to index
    %c0_58 = arith.constant 0 : index
    %c0_59 = arith.constant 0 : index
    %230 = vector.load %arg5[%229, %c0_58, %c0_59] : memref<8x2x64xf32, #tpu.memory_space<vmem>>, vector<1x2x32xf32>
    %231 = vector.shape_cast %230 : vector<1x2x32xf32> to vector<2x32xf32>
    %232 = vector.shape_cast %228 : vector<2x32xf32> to vector<1x2x32xf32>
    tpu.vector_store %arg5[%229, %c0_58, %c0_59], %232 {strides = array<i32>} : memref<8x2x64xf32, #tpu.memory_space<vmem>>, vector<1x2x32xf32>,
    %c7_i32_60 = arith.constant 7 : i32
    %233 = arith.subi %c7_i32_60, %c3_i32 : i32
    %234 = arith.index_cast %233 : i32 to index
    %c0_61 = arith.constant 0 : index
    %c96_62 = arith.constant 96 : index
    %235 = vector.load %arg6[%234, %c0_61, %c96_62] : memref<8x2x192xf32, #tpu.memory_space<vmem>>, vector<1x2x96xf32>
    %236 = vector.shape_cast %235 : vector<1x2x96xf32> to vector<2x96xf32>
    %237 = vector.extract_strided_slice %203 {offsets = [0, 96], sizes = [2, 96], strides = [1, 1]} : vector<2x192xf32> to vector<2x96xf32>
    %238 = vector.extract_strided_slice %200 {offsets = [0, 32], sizes = [2, 32], strides = [1, 1]} : vector<2x64xf32> to vector<2x32xf32>
    %239 = vector.extract_strided_slice %236 {offsets = [0, 0], sizes = [2, 64], strides = [1, 1]} : vector<2x96xf32> to vector<2x64xf32>
    %240 = vector.extract_strided_slice %237 {offsets = [0, 0], sizes = [2, 64], strides = [1, 1]} : vector<2x96xf32> to vector<2x64xf32>
    %241 = arith.addf %239, %240 : vector<2x64xf32>
    %242 = arith.negf %241 : vector<2x64xf32>
    %243 = math.exp %242 : vector<2x64xf32>
    %cst_63 = arith.constant 1.000000e+00 : f32
    %244 = vector.broadcast %cst_63 : f32 to vector<2x64xf32>
    %245 = arith.addf %244, %243 : vector<2x64xf32>
    %246 = arith.divf %244, %245 : vector<2x64xf32>
    %247 = vector.extract_strided_slice %246 {offsets = [0, 0], sizes = [2, 32], strides = [1, 1]} : vector<2x64xf32> to vector<2x32xf32>
    %248 = vector.extract_strided_slice %246 {offsets = [0, 32], sizes = [2, 32], strides = [1, 1]} : vector<2x64xf32> to vector<2x32xf32>
    %249 = vector.extract_strided_slice %236 {offsets = [0, 64], sizes = [2, 32], strides = [1, 1]} : vector<2x96xf32> to vector<2x32xf32>
    %250 = vector.extract_strided_slice %237 {offsets = [0, 64], sizes = [2, 32], strides = [1, 1]} : vector<2x96xf32> to vector<2x32xf32>
    %251 = arith.mulf %247, %250 : vector<2x32xf32>
    %252 = arith.addf %249, %251 : vector<2x32xf32>
    %253 = math.tanh %252 : vector<2x32xf32>
    %cst_64 = arith.constant 1.000000e+00 : f32
    %254 = vector.broadcast %cst_64 : f32 to vector<2x32xf32>
    %255 = arith.subf %254, %248 : vector<2x32xf32>
    %256 = arith.mulf %255, %253 : vector<2x32xf32>
    %257 = arith.mulf %248, %238 : vector<2x32xf32>
    %258 = arith.addf %256, %257 : vector<2x32xf32>
    %259 = arith.index_cast %233 : i32 to index
    %c0_65 = arith.constant 0 : index
    %c32_66 = arith.constant 32 : index
    %260 = vector.load %arg5[%259, %c0_65, %c32_66] : memref<8x2x64xf32, #tpu.memory_space<vmem>>, vector<1x2x32xf32>
    %261 = vector.shape_cast %260 : vector<1x2x32xf32> to vector<2x32xf32>
    %262 = vector.shape_cast %258 : vector<2x32xf32> to vector<1x2x32xf32>
    tpu.vector_store %arg5[%259, %c0_65, %c32_66], %262 {strides = array<i32>} : memref<8x2x64xf32, #tpu.memory_space<vmem>>, vector<1x2x32xf32>,
    %263 = tpu.concatenate %228, %258 in 1 : vector<2x32xf32>, vector<2x32xf32> -> vector<2x64xf32>
    %c4_i32 = arith.constant 4 : i32
    %cst_67 = arith.constant dense<0.000000e+00> : vector<2x192xf32>
    %264 = tpu.matmul %263, %9, %cst_67 {dimension_numbers = #tpu.dot_dimension_numbers<[1], [0], [0], [1], [0, 0, 1, 1], [], []>} : vector<2x64xf32>, vector<64x192xf32>, vector<2x192xf32> -> vector<2x192xf32>
    %265 = vector.broadcast %10 : vector<1x192xf32> to vector<2x192xf32>
    %266 = arith.addf %264, %265 : vector<2x192xf32>
    %267 = arith.index_cast %c4_i32 : i32 to index
    %c0_68 = arith.constant 0 : index
    %c0_69 = arith.constant 0 : index
    %268 = vector.load %arg6[%267, %c0_68, %c0_69] : memref<8x2x192xf32, #tpu.memory_space<vmem>>, vector<1x2x96xf32>
    %269 = vector.shape_cast %268 : vector<1x2x96xf32> to vector<2x96xf32>
    %270 = vector.extract_strided_slice %266 {offsets = [0, 0], sizes = [2, 96], strides = [1, 1]} : vector<2x192xf32> to vector<2x96xf32>
    %271 = vector.extract_strided_slice %263 {offsets = [0, 0], sizes = [2, 32], strides = [1, 1]} : vector<2x64xf32> to vector<2x32xf32>
    %272 = vector.extract_strided_slice %269 {offsets = [0, 0], sizes = [2, 64], strides = [1, 1]} : vector<2x96xf32> to vector<2x64xf32>
    %273 = vector.extract_strided_slice %270 {offsets = [0, 0], sizes = [2, 64], strides = [1, 1]} : vector<2x96xf32> to vector<2x64xf32>
    %274 = arith.addf %272, %273 : vector<2x64xf32>
    %275 = arith.negf %274 : vector<2x64xf32>
    %276 = math.exp %275 : vector<2x64xf32>
    %cst_70 = arith.constant 1.000000e+00 : f32
    %277 = vector.broadcast %cst_70 : f32 to vector<2x64xf32>
    %278 = arith.addf %277, %276 : vector<2x64xf32>
    %279 = arith.divf %277, %278 : vector<2x64xf32>
    %280 = vector.extract_strided_slice %279 {offsets = [0, 0], sizes = [2, 32], strides = [1, 1]} : vector<2x64xf32> to vector<2x32xf32>
    %281 = vector.extract_strided_slice %279 {offsets = [0, 32], sizes = [2, 32], strides = [1, 1]} : vector<2x64xf32> to vector<2x32xf32>
    %282 = vector.extract_strided_slice %269 {offsets = [0, 64], sizes = [2, 32], strides = [1, 1]} : vector<2x96xf32> to vector<2x32xf32>
    %283 = vector.extract_strided_slice %270 {offsets = [0, 64], sizes = [2, 32], strides = [1, 1]} : vector<2x96xf32> to vector<2x32xf32>
    %284 = arith.mulf %280, %283 : vector<2x32xf32>
    %285 = arith.addf %282, %284 : vector<2x32xf32>
    %286 = math.tanh %285 : vector<2x32xf32>
    %cst_71 = arith.constant 1.000000e+00 : f32
    %287 = vector.broadcast %cst_71 : f32 to vector<2x32xf32>
    %288 = arith.subf %287, %281 : vector<2x32xf32>
    %289 = arith.mulf %288, %286 : vector<2x32xf32>
    %290 = arith.mulf %281, %271 : vector<2x32xf32>
    %291 = arith.addf %289, %290 : vector<2x32xf32>
    %292 = arith.index_cast %c4_i32 : i32 to index
    %c0_72 = arith.constant 0 : index
    %c0_73 = arith.constant 0 : index
    %293 = vector.load %arg5[%292, %c0_72, %c0_73] : memref<8x2x64xf32, #tpu.memory_space<vmem>>, vector<1x2x32xf32>
    %294 = vector.shape_cast %293 : vector<1x2x32xf32> to vector<2x32xf32>
    %295 = vector.shape_cast %291 : vector<2x32xf32> to vector<1x2x32xf32>
    tpu.vector_store %arg5[%292, %c0_72, %c0_73], %295 {strides = array<i32>} : memref<8x2x64xf32, #tpu.memory_space<vmem>>, vector<1x2x32xf32>,
    %c7_i32_74 = arith.constant 7 : i32
    %296 = arith.subi %c7_i32_74, %c4_i32 : i32
    %297 = arith.index_cast %296 : i32 to index
    %c0_75 = arith.constant 0 : index
    %c96_76 = arith.constant 96 : index
    %298 = vector.load %arg6[%297, %c0_75, %c96_76] : memref<8x2x192xf32, #tpu.memory_space<vmem>>, vector<1x2x96xf32>
    %299 = vector.shape_cast %298 : vector<1x2x96xf32> to vector<2x96xf32>
    %300 = vector.extract_strided_slice %266 {offsets = [0, 96], sizes = [2, 96], strides = [1, 1]} : vector<2x192xf32> to vector<2x96xf32>
    %301 = vector.extract_strided_slice %263 {offsets = [0, 32], sizes = [2, 32], strides = [1, 1]} : vector<2x64xf32> to vector<2x32xf32>
    %302 = vector.extract_strided_slice %299 {offsets = [0, 0], sizes = [2, 64], strides = [1, 1]} : vector<2x96xf32> to vector<2x64xf32>
    %303 = vector.extract_strided_slice %300 {offsets = [0, 0], sizes = [2, 64], strides = [1, 1]} : vector<2x96xf32> to vector<2x64xf32>
    %304 = arith.addf %302, %303 : vector<2x64xf32>
    %305 = arith.negf %304 : vector<2x64xf32>
    %306 = math.exp %305 : vector<2x64xf32>
    %cst_77 = arith.constant 1.000000e+00 : f32
    %307 = vector.broadcast %cst_77 : f32 to vector<2x64xf32>
    %308 = arith.addf %307, %306 : vector<2x64xf32>
    %309 = arith.divf %307, %308 : vector<2x64xf32>
    %310 = vector.extract_strided_slice %309 {offsets = [0, 0], sizes = [2, 32], strides = [1, 1]} : vector<2x64xf32> to vector<2x32xf32>
    %311 = vector.extract_strided_slice %309 {offsets = [0, 32], sizes = [2, 32], strides = [1, 1]} : vector<2x64xf32> to vector<2x32xf32>
    %312 = vector.extract_strided_slice %299 {offsets = [0, 64], sizes = [2, 32], strides = [1, 1]} : vector<2x96xf32> to vector<2x32xf32>
    %313 = vector.extract_strided_slice %300 {offsets = [0, 64], sizes = [2, 32], strides = [1, 1]} : vector<2x96xf32> to vector<2x32xf32>
    %314 = arith.mulf %310, %313 : vector<2x32xf32>
    %315 = arith.addf %312, %314 : vector<2x32xf32>
    %316 = math.tanh %315 : vector<2x32xf32>
    %cst_78 = arith.constant 1.000000e+00 : f32
    %317 = vector.broadcast %cst_78 : f32 to vector<2x32xf32>
    %318 = arith.subf %317, %311 : vector<2x32xf32>
    %319 = arith.mulf %318, %316 : vector<2x32xf32>
    %320 = arith.mulf %311, %301 : vector<2x32xf32>
    %321 = arith.addf %319, %320 : vector<2x32xf32>
    %322 = arith.index_cast %296 : i32 to index
    %c0_79 = arith.constant 0 : index
    %c32_80 = arith.constant 32 : index
    %323 = vector.load %arg5[%322, %c0_79, %c32_80] : memref<8x2x64xf32, #tpu.memory_space<vmem>>, vector<1x2x32xf32>
    %324 = vector.shape_cast %323 : vector<1x2x32xf32> to vector<2x32xf32>
    %325 = vector.shape_cast %321 : vector<2x32xf32> to vector<1x2x32xf32>
    tpu.vector_store %arg5[%322, %c0_79, %c32_80], %325 {strides = array<i32>} : memref<8x2x64xf32, #tpu.memory_space<vmem>>, vector<1x2x32xf32>,
    %326 = tpu.concatenate %291, %321 in 1 : vector<2x32xf32>, vector<2x32xf32> -> vector<2x64xf32>
    %c5_i32 = arith.constant 5 : i32
    %cst_81 = arith.constant dense<0.000000e+00> : vector<2x192xf32>
    %327 = tpu.matmul %326, %9, %cst_81 {dimension_numbers = #tpu.dot_dimension_numbers<[1], [0], [0], [1], [0, 0, 1, 1], [], []>} : vector<2x64xf32>, vector<64x192xf32>, vector<2x192xf32> -> vector<2x192xf32>
    %328 = vector.broadcast %10 : vector<1x192xf32> to vector<2x192xf32>
    %329 = arith.addf %327, %328 : vector<2x192xf32>
    %330 = arith.index_cast %c5_i32 : i32 to index
    %c0_82 = arith.constant 0 : index
    %c0_83 = arith.constant 0 : index
    %331 = vector.load %arg6[%330, %c0_82, %c0_83] : memref<8x2x192xf32, #tpu.memory_space<vmem>>, vector<1x2x96xf32>
    %332 = vector.shape_cast %331 : vector<1x2x96xf32> to vector<2x96xf32>
    %333 = vector.extract_strided_slice %329 {offsets = [0, 0], sizes = [2, 96], strides = [1, 1]} : vector<2x192xf32> to vector<2x96xf32>
    %334 = vector.extract_strided_slice %326 {offsets = [0, 0], sizes = [2, 32], strides = [1, 1]} : vector<2x64xf32> to vector<2x32xf32>
    %335 = vector.extract_strided_slice %332 {offsets = [0, 0], sizes = [2, 64], strides = [1, 1]} : vector<2x96xf32> to vector<2x64xf32>
    %336 = vector.extract_strided_slice %333 {offsets = [0, 0], sizes = [2, 64], strides = [1, 1]} : vector<2x96xf32> to vector<2x64xf32>
    %337 = arith.addf %335, %336 : vector<2x64xf32>
    %338 = arith.negf %337 : vector<2x64xf32>
    %339 = math.exp %338 : vector<2x64xf32>
    %cst_84 = arith.constant 1.000000e+00 : f32
    %340 = vector.broadcast %cst_84 : f32 to vector<2x64xf32>
    %341 = arith.addf %340, %339 : vector<2x64xf32>
    %342 = arith.divf %340, %341 : vector<2x64xf32>
    %343 = vector.extract_strided_slice %342 {offsets = [0, 0], sizes = [2, 32], strides = [1, 1]} : vector<2x64xf32> to vector<2x32xf32>
    %344 = vector.extract_strided_slice %342 {offsets = [0, 32], sizes = [2, 32], strides = [1, 1]} : vector<2x64xf32> to vector<2x32xf32>
    %345 = vector.extract_strided_slice %332 {offsets = [0, 64], sizes = [2, 32], strides = [1, 1]} : vector<2x96xf32> to vector<2x32xf32>
    %346 = vector.extract_strided_slice %333 {offsets = [0, 64], sizes = [2, 32], strides = [1, 1]} : vector<2x96xf32> to vector<2x32xf32>
    %347 = arith.mulf %343, %346 : vector<2x32xf32>
    %348 = arith.addf %345, %347 : vector<2x32xf32>
    %349 = math.tanh %348 : vector<2x32xf32>
    %cst_85 = arith.constant 1.000000e+00 : f32
    %350 = vector.broadcast %cst_85 : f32 to vector<2x32xf32>
    %351 = arith.subf %350, %344 : vector<2x32xf32>
    %352 = arith.mulf %351, %349 : vector<2x32xf32>
    %353 = arith.mulf %344, %334 : vector<2x32xf32>
    %354 = arith.addf %352, %353 : vector<2x32xf32>
    %355 = arith.index_cast %c5_i32 : i32 to index
    %c0_86 = arith.constant 0 : index
    %c0_87 = arith.constant 0 : index
    %356 = vector.load %arg5[%355, %c0_86, %c0_87] : memref<8x2x64xf32, #tpu.memory_space<vmem>>, vector<1x2x32xf32>
    %357 = vector.shape_cast %356 : vector<1x2x32xf32> to vector<2x32xf32>
    %358 = vector.shape_cast %354 : vector<2x32xf32> to vector<1x2x32xf32>
    tpu.vector_store %arg5[%355, %c0_86, %c0_87], %358 {strides = array<i32>} : memref<8x2x64xf32, #tpu.memory_space<vmem>>, vector<1x2x32xf32>,
    %c7_i32_88 = arith.constant 7 : i32
    %359 = arith.subi %c7_i32_88, %c5_i32 : i32
    %360 = arith.index_cast %359 : i32 to index
    %c0_89 = arith.constant 0 : index
    %c96_90 = arith.constant 96 : index
    %361 = vector.load %arg6[%360, %c0_89, %c96_90] : memref<8x2x192xf32, #tpu.memory_space<vmem>>, vector<1x2x96xf32>
    %362 = vector.shape_cast %361 : vector<1x2x96xf32> to vector<2x96xf32>
    %363 = vector.extract_strided_slice %329 {offsets = [0, 96], sizes = [2, 96], strides = [1, 1]} : vector<2x192xf32> to vector<2x96xf32>
    %364 = vector.extract_strided_slice %326 {offsets = [0, 32], sizes = [2, 32], strides = [1, 1]} : vector<2x64xf32> to vector<2x32xf32>
    %365 = vector.extract_strided_slice %362 {offsets = [0, 0], sizes = [2, 64], strides = [1, 1]} : vector<2x96xf32> to vector<2x64xf32>
    %366 = vector.extract_strided_slice %363 {offsets = [0, 0], sizes = [2, 64], strides = [1, 1]} : vector<2x96xf32> to vector<2x64xf32>
    %367 = arith.addf %365, %366 : vector<2x64xf32>
    %368 = arith.negf %367 : vector<2x64xf32>
    %369 = math.exp %368 : vector<2x64xf32>
    %cst_91 = arith.constant 1.000000e+00 : f32
    %370 = vector.broadcast %cst_91 : f32 to vector<2x64xf32>
    %371 = arith.addf %370, %369 : vector<2x64xf32>
    %372 = arith.divf %370, %371 : vector<2x64xf32>
    %373 = vector.extract_strided_slice %372 {offsets = [0, 0], sizes = [2, 32], strides = [1, 1]} : vector<2x64xf32> to vector<2x32xf32>
    %374 = vector.extract_strided_slice %372 {offsets = [0, 32], sizes = [2, 32], strides = [1, 1]} : vector<2x64xf32> to vector<2x32xf32>
    %375 = vector.extract_strided_slice %362 {offsets = [0, 64], sizes = [2, 32], strides = [1, 1]} : vector<2x96xf32> to vector<2x32xf32>
    %376 = vector.extract_strided_slice %363 {offsets = [0, 64], sizes = [2, 32], strides = [1, 1]} : vector<2x96xf32> to vector<2x32xf32>
    %377 = arith.mulf %373, %376 : vector<2x32xf32>
    %378 = arith.addf %375, %377 : vector<2x32xf32>
    %379 = math.tanh %378 : vector<2x32xf32>
    %cst_92 = arith.constant 1.000000e+00 : f32
    %380 = vector.broadcast %cst_92 : f32 to vector<2x32xf32>
    %381 = arith.subf %380, %374 : vector<2x32xf32>
    %382 = arith.mulf %381, %379 : vector<2x32xf32>
    %383 = arith.mulf %374, %364 : vector<2x32xf32>
    %384 = arith.addf %382, %383 : vector<2x32xf32>
    %385 = arith.index_cast %359 : i32 to index
    %c0_93 = arith.constant 0 : index
    %c32_94 = arith.constant 32 : index
    %386 = vector.load %arg5[%385, %c0_93, %c32_94] : memref<8x2x64xf32, #tpu.memory_space<vmem>>, vector<1x2x32xf32>
    %387 = vector.shape_cast %386 : vector<1x2x32xf32> to vector<2x32xf32>
    %388 = vector.shape_cast %384 : vector<2x32xf32> to vector<1x2x32xf32>
    tpu.vector_store %arg5[%385, %c0_93, %c32_94], %388 {strides = array<i32>} : memref<8x2x64xf32, #tpu.memory_space<vmem>>, vector<1x2x32xf32>,
    %389 = tpu.concatenate %354, %384 in 1 : vector<2x32xf32>, vector<2x32xf32> -> vector<2x64xf32>
    %c6_i32 = arith.constant 6 : i32
    %cst_95 = arith.constant dense<0.000000e+00> : vector<2x192xf32>
    %390 = tpu.matmul %389, %9, %cst_95 {dimension_numbers = #tpu.dot_dimension_numbers<[1], [0], [0], [1], [0, 0, 1, 1], [], []>} : vector<2x64xf32>, vector<64x192xf32>, vector<2x192xf32> -> vector<2x192xf32>
    %391 = vector.broadcast %10 : vector<1x192xf32> to vector<2x192xf32>
    %392 = arith.addf %390, %391 : vector<2x192xf32>
    %393 = arith.index_cast %c6_i32 : i32 to index
    %c0_96 = arith.constant 0 : index
    %c0_97 = arith.constant 0 : index
    %394 = vector.load %arg6[%393, %c0_96, %c0_97] : memref<8x2x192xf32, #tpu.memory_space<vmem>>, vector<1x2x96xf32>
    %395 = vector.shape_cast %394 : vector<1x2x96xf32> to vector<2x96xf32>
    %396 = vector.extract_strided_slice %392 {offsets = [0, 0], sizes = [2, 96], strides = [1, 1]} : vector<2x192xf32> to vector<2x96xf32>
    %397 = vector.extract_strided_slice %389 {offsets = [0, 0], sizes = [2, 32], strides = [1, 1]} : vector<2x64xf32> to vector<2x32xf32>
    %398 = vector.extract_strided_slice %395 {offsets = [0, 0], sizes = [2, 64], strides = [1, 1]} : vector<2x96xf32> to vector<2x64xf32>
    %399 = vector.extract_strided_slice %396 {offsets = [0, 0], sizes = [2, 64], strides = [1, 1]} : vector<2x96xf32> to vector<2x64xf32>
    %400 = arith.addf %398, %399 : vector<2x64xf32>
    %401 = arith.negf %400 : vector<2x64xf32>
    %402 = math.exp %401 : vector<2x64xf32>
    %cst_98 = arith.constant 1.000000e+00 : f32
    %403 = vector.broadcast %cst_98 : f32 to vector<2x64xf32>
    %404 = arith.addf %403, %402 : vector<2x64xf32>
    %405 = arith.divf %403, %404 : vector<2x64xf32>
    %406 = vector.extract_strided_slice %405 {offsets = [0, 0], sizes = [2, 32], strides = [1, 1]} : vector<2x64xf32> to vector<2x32xf32>
    %407 = vector.extract_strided_slice %405 {offsets = [0, 32], sizes = [2, 32], strides = [1, 1]} : vector<2x64xf32> to vector<2x32xf32>
    %408 = vector.extract_strided_slice %395 {offsets = [0, 64], sizes = [2, 32], strides = [1, 1]} : vector<2x96xf32> to vector<2x32xf32>
    %409 = vector.extract_strided_slice %396 {offsets = [0, 64], sizes = [2, 32], strides = [1, 1]} : vector<2x96xf32> to vector<2x32xf32>
    %410 = arith.mulf %406, %409 : vector<2x32xf32>
    %411 = arith.addf %408, %410 : vector<2x32xf32>
    %412 = math.tanh %411 : vector<2x32xf32>
    %cst_99 = arith.constant 1.000000e+00 : f32
    %413 = vector.broadcast %cst_99 : f32 to vector<2x32xf32>
    %414 = arith.subf %413, %407 : vector<2x32xf32>
    %415 = arith.mulf %414, %412 : vector<2x32xf32>
    %416 = arith.mulf %407, %397 : vector<2x32xf32>
    %417 = arith.addf %415, %416 : vector<2x32xf32>
    %418 = arith.index_cast %c6_i32 : i32 to index
    %c0_100 = arith.constant 0 : index
    %c0_101 = arith.constant 0 : index
    %419 = vector.load %arg5[%418, %c0_100, %c0_101] : memref<8x2x64xf32, #tpu.memory_space<vmem>>, vector<1x2x32xf32>
    %420 = vector.shape_cast %419 : vector<1x2x32xf32> to vector<2x32xf32>
    %421 = vector.shape_cast %417 : vector<2x32xf32> to vector<1x2x32xf32>
    tpu.vector_store %arg5[%418, %c0_100, %c0_101], %421 {strides = array<i32>} : memref<8x2x64xf32, #tpu.memory_space<vmem>>, vector<1x2x32xf32>,
    %c7_i32_102 = arith.constant 7 : i32
    %422 = arith.subi %c7_i32_102, %c6_i32 : i32
    %423 = arith.index_cast %422 : i32 to index
    %c0_103 = arith.constant 0 : index
    %c96_104 = arith.constant 96 : index
    %424 = vector.load %arg6[%423, %c0_103, %c96_104] : memref<8x2x192xf32, #tpu.memory_space<vmem>>, vector<1x2x96xf32>
    %425 = vector.shape_cast %424 : vector<1x2x96xf32> to vector<2x96xf32>
    %426 = vector.extract_strided_slice %392 {offsets = [0, 96], sizes = [2, 96], strides = [1, 1]} : vector<2x192xf32> to vector<2x96xf32>
    %427 = vector.extract_strided_slice %389 {offsets = [0, 32], sizes = [2, 32], strides = [1, 1]} : vector<2x64xf32> to vector<2x32xf32>
    %428 = vector.extract_strided_slice %425 {offsets = [0, 0], sizes = [2, 64], strides = [1, 1]} : vector<2x96xf32> to vector<2x64xf32>
    %429 = vector.extract_strided_slice %426 {offsets = [0, 0], sizes = [2, 64], strides = [1, 1]} : vector<2x96xf32> to vector<2x64xf32>
    %430 = arith.addf %428, %429 : vector<2x64xf32>
    %431 = arith.negf %430 : vector<2x64xf32>
    %432 = math.exp %431 : vector<2x64xf32>
    %cst_105 = arith.constant 1.000000e+00 : f32
    %433 = vector.broadcast %cst_105 : f32 to vector<2x64xf32>
    %434 = arith.addf %433, %432 : vector<2x64xf32>
    %435 = arith.divf %433, %434 : vector<2x64xf32>
    %436 = vector.extract_strided_slice %435 {offsets = [0, 0], sizes = [2, 32], strides = [1, 1]} : vector<2x64xf32> to vector<2x32xf32>
    %437 = vector.extract_strided_slice %435 {offsets = [0, 32], sizes = [2, 32], strides = [1, 1]} : vector<2x64xf32> to vector<2x32xf32>
    %438 = vector.extract_strided_slice %425 {offsets = [0, 64], sizes = [2, 32], strides = [1, 1]} : vector<2x96xf32> to vector<2x32xf32>
    %439 = vector.extract_strided_slice %426 {offsets = [0, 64], sizes = [2, 32], strides = [1, 1]} : vector<2x96xf32> to vector<2x32xf32>
    %440 = arith.mulf %436, %439 : vector<2x32xf32>
    %441 = arith.addf %438, %440 : vector<2x32xf32>
    %442 = math.tanh %441 : vector<2x32xf32>
    %cst_106 = arith.constant 1.000000e+00 : f32
    %443 = vector.broadcast %cst_106 : f32 to vector<2x32xf32>
    %444 = arith.subf %443, %437 : vector<2x32xf32>
    %445 = arith.mulf %444, %442 : vector<2x32xf32>
    %446 = arith.mulf %437, %427 : vector<2x32xf32>
    %447 = arith.addf %445, %446 : vector<2x32xf32>
    %448 = arith.index_cast %422 : i32 to index
    %c0_107 = arith.constant 0 : index
    %c32_108 = arith.constant 32 : index
    %449 = vector.load %arg5[%448, %c0_107, %c32_108] : memref<8x2x64xf32, #tpu.memory_space<vmem>>, vector<1x2x32xf32>
    %450 = vector.shape_cast %449 : vector<1x2x32xf32> to vector<2x32xf32>
    %451 = vector.shape_cast %447 : vector<2x32xf32> to vector<1x2x32xf32>
    tpu.vector_store %arg5[%448, %c0_107, %c32_108], %451 {strides = array<i32>} : memref<8x2x64xf32, #tpu.memory_space<vmem>>, vector<1x2x32xf32>,
    %452 = tpu.concatenate %417, %447 in 1 : vector<2x32xf32>, vector<2x32xf32> -> vector<2x64xf32>
    %c7_i32_109 = arith.constant 7 : i32
    %cst_110 = arith.constant dense<0.000000e+00> : vector<2x192xf32>
    %453 = tpu.matmul %452, %9, %cst_110 {dimension_numbers = #tpu.dot_dimension_numbers<[1], [0], [0], [1], [0, 0, 1, 1], [], []>} : vector<2x64xf32>, vector<64x192xf32>, vector<2x192xf32> -> vector<2x192xf32>
    %454 = vector.broadcast %10 : vector<1x192xf32> to vector<2x192xf32>
    %455 = arith.addf %453, %454 : vector<2x192xf32>
    %456 = arith.index_cast %c7_i32_109 : i32 to index
    %c0_111 = arith.constant 0 : index
    %c0_112 = arith.constant 0 : index
    %457 = vector.load %arg6[%456, %c0_111, %c0_112] : memref<8x2x192xf32, #tpu.memory_space<vmem>>, vector<1x2x96xf32>
    %458 = vector.shape_cast %457 : vector<1x2x96xf32> to vector<2x96xf32>
    %459 = vector.extract_strided_slice %455 {offsets = [0, 0], sizes = [2, 96], strides = [1, 1]} : vector<2x192xf32> to vector<2x96xf32>
    %460 = vector.extract_strided_slice %452 {offsets = [0, 0], sizes = [2, 32], strides = [1, 1]} : vector<2x64xf32> to vector<2x32xf32>
    %461 = vector.extract_strided_slice %458 {offsets = [0, 0], sizes = [2, 64], strides = [1, 1]} : vector<2x96xf32> to vector<2x64xf32>
    %462 = vector.extract_strided_slice %459 {offsets = [0, 0], sizes = [2, 64], strides = [1, 1]} : vector<2x96xf32> to vector<2x64xf32>
    %463 = arith.addf %461, %462 : vector<2x64xf32>
    %464 = arith.negf %463 : vector<2x64xf32>
    %465 = math.exp %464 : vector<2x64xf32>
    %cst_113 = arith.constant 1.000000e+00 : f32
    %466 = vector.broadcast %cst_113 : f32 to vector<2x64xf32>
    %467 = arith.addf %466, %465 : vector<2x64xf32>
    %468 = arith.divf %466, %467 : vector<2x64xf32>
    %469 = vector.extract_strided_slice %468 {offsets = [0, 0], sizes = [2, 32], strides = [1, 1]} : vector<2x64xf32> to vector<2x32xf32>
    %470 = vector.extract_strided_slice %468 {offsets = [0, 32], sizes = [2, 32], strides = [1, 1]} : vector<2x64xf32> to vector<2x32xf32>
    %471 = vector.extract_strided_slice %458 {offsets = [0, 64], sizes = [2, 32], strides = [1, 1]} : vector<2x96xf32> to vector<2x32xf32>
    %472 = vector.extract_strided_slice %459 {offsets = [0, 64], sizes = [2, 32], strides = [1, 1]} : vector<2x96xf32> to vector<2x32xf32>
    %473 = arith.mulf %469, %472 : vector<2x32xf32>
    %474 = arith.addf %471, %473 : vector<2x32xf32>
    %475 = math.tanh %474 : vector<2x32xf32>
    %cst_114 = arith.constant 1.000000e+00 : f32
    %476 = vector.broadcast %cst_114 : f32 to vector<2x32xf32>
    %477 = arith.subf %476, %470 : vector<2x32xf32>
    %478 = arith.mulf %477, %475 : vector<2x32xf32>
    %479 = arith.mulf %470, %460 : vector<2x32xf32>
    %480 = arith.addf %478, %479 : vector<2x32xf32>
    %481 = arith.index_cast %c7_i32_109 : i32 to index
    %c0_115 = arith.constant 0 : index
    %c0_116 = arith.constant 0 : index
    %482 = vector.load %arg5[%481, %c0_115, %c0_116] : memref<8x2x64xf32, #tpu.memory_space<vmem>>, vector<1x2x32xf32>
    %483 = vector.shape_cast %482 : vector<1x2x32xf32> to vector<2x32xf32>
    %484 = vector.shape_cast %480 : vector<2x32xf32> to vector<1x2x32xf32>
    tpu.vector_store %arg5[%481, %c0_115, %c0_116], %484 {strides = array<i32>} : memref<8x2x64xf32, #tpu.memory_space<vmem>>, vector<1x2x32xf32>,
    %c7_i32_117 = arith.constant 7 : i32
    %485 = arith.subi %c7_i32_117, %c7_i32_109 : i32
    %486 = arith.index_cast %485 : i32 to index
    %c0_118 = arith.constant 0 : index
    %c96_119 = arith.constant 96 : index
    %487 = vector.load %arg6[%486, %c0_118, %c96_119] : memref<8x2x192xf32, #tpu.memory_space<vmem>>, vector<1x2x96xf32>
    %488 = vector.shape_cast %487 : vector<1x2x96xf32> to vector<2x96xf32>
    %489 = vector.extract_strided_slice %455 {offsets = [0, 96], sizes = [2, 96], strides = [1, 1]} : vector<2x192xf32> to vector<2x96xf32>
    %490 = vector.extract_strided_slice %452 {offsets = [0, 32], sizes = [2, 32], strides = [1, 1]} : vector<2x64xf32> to vector<2x32xf32>
    %491 = vector.extract_strided_slice %488 {offsets = [0, 0], sizes = [2, 64], strides = [1, 1]} : vector<2x96xf32> to vector<2x64xf32>
    %492 = vector.extract_strided_slice %489 {offsets = [0, 0], sizes = [2, 64], strides = [1, 1]} : vector<2x96xf32> to vector<2x64xf32>
    %493 = arith.addf %491, %492 : vector<2x64xf32>
    %494 = arith.negf %493 : vector<2x64xf32>
    %495 = math.exp %494 : vector<2x64xf32>
    %cst_120 = arith.constant 1.000000e+00 : f32
    %496 = vector.broadcast %cst_120 : f32 to vector<2x64xf32>
    %497 = arith.addf %496, %495 : vector<2x64xf32>
    %498 = arith.divf %496, %497 : vector<2x64xf32>
    %499 = vector.extract_strided_slice %498 {offsets = [0, 0], sizes = [2, 32], strides = [1, 1]} : vector<2x64xf32> to vector<2x32xf32>
    %500 = vector.extract_strided_slice %498 {offsets = [0, 32], sizes = [2, 32], strides = [1, 1]} : vector<2x64xf32> to vector<2x32xf32>
    %501 = vector.extract_strided_slice %488 {offsets = [0, 64], sizes = [2, 32], strides = [1, 1]} : vector<2x96xf32> to vector<2x32xf32>
    %502 = vector.extract_strided_slice %489 {offsets = [0, 64], sizes = [2, 32], strides = [1, 1]} : vector<2x96xf32> to vector<2x32xf32>
    %503 = arith.mulf %499, %502 : vector<2x32xf32>
    %504 = arith.addf %501, %503 : vector<2x32xf32>
    %505 = math.tanh %504 : vector<2x32xf32>
    %cst_121 = arith.constant 1.000000e+00 : f32
    %506 = vector.broadcast %cst_121 : f32 to vector<2x32xf32>
    %507 = arith.subf %506, %500 : vector<2x32xf32>
    %508 = arith.mulf %507, %505 : vector<2x32xf32>
    %509 = arith.mulf %500, %490 : vector<2x32xf32>
    %510 = arith.addf %508, %509 : vector<2x32xf32>
    %511 = arith.index_cast %485 : i32 to index
    %c0_122 = arith.constant 0 : index
    %c32_123 = arith.constant 32 : index
    %512 = vector.load %arg5[%511, %c0_122, %c32_123] : memref<8x2x64xf32, #tpu.memory_space<vmem>>, vector<1x2x32xf32>
    %513 = vector.shape_cast %512 : vector<1x2x32xf32> to vector<2x32xf32>
    %514 = vector.shape_cast %510 : vector<2x32xf32> to vector<1x2x32xf32>
    tpu.vector_store %arg5[%511, %c0_122, %c32_123], %514 {strides = array<i32>} : memref<8x2x64xf32, #tpu.memory_space<vmem>>, vector<1x2x32xf32>,
    %515 = tpu.concatenate %480, %510 in 1 : vector<2x32xf32>, vector<2x32xf32> -> vector<2x64xf32>
    %c8_i32 = arith.constant 8 : i32
    return
  }
}

</mosaic_0001>

<llo_original>
// kernel: tpu_custom_call.1
$region0: #{tpu_custom_call.1}
  #allocation0 [shape = 'u32[]', space=smem, size = 0x4, offset = 0x4, fixed_abs, tag = 'smem constant byte address 0x4 - core index']
  #allocation1 [shape = 'u32[144,128]{1,0:T(1,128)}', space=vmem, size = 0x12000, scoped, tag = 'internal scratch']
  #allocation2 [shape = 'f32[8,2,192]{2,1,0:T(2,128)}', space=vmem, size = 0x4000, scoped, tag = 'scratch operand']
  %s0 = inlined_call_operand.hbm [shape: f32[8,2,16], index: 0, kind: input, shape index: {}]
  %s1 = inlined_call_operand.hbm [shape: f32[16,192], index: 1, kind: input, shape index: {}]
  %s2 = inlined_call_operand.vmem [shape: f32[1,192], index: 2, kind: input, shape index: {}]
  %s3 = inlined_call_operand.hbm [shape: f32[64,192], index: 3, kind: input, shape index: {}]
  %s4 = inlined_call_operand.vmem [shape: f32[1,192], index: 4, kind: input, shape index: {}]
  %s5 = inlined_call_operand.hbm [shape: f32[8,2,64], index: 5, kind: output, shape index: {}]
  %s6 = sld [smem:[#allocation0]]
  $region42: #{tpu_custom_call.1} parent=0
    _
  %s8 = ssub.s32 1, %s6
  %s9 = scalar_select 0, %s8, %s6
  $region1: #{tpu_custom_call.1} parent=0
    #allocation3 [shape = 'u8[8192]{0}', space=vmem, size = 0x2000, scoped, tag = 'input window, operand 0, single buffered']
    #allocation4 [shape = 's32[1]{0}', space=sflag, size = 0x4, scoped, tag = 'scoped memory for tpu_custom_call.1']
    #allocation5 [shape = 's32[1]{0}', space=sflag, size = 0x4, scoped, tag = 'scoped memory for tpu_custom_call.1']
    #allocation6 [shape = 'u8[16384]{0}', space=vmem, size = 0x4000, scoped, tag = 'input window, operand 1, single buffered']
    #allocation7 [shape = 's32[1]{0}', space=sflag, size = 0x4, scoped, tag = 'scoped memory for tpu_custom_call.1']
    #allocation8 [shape = 'u8[65536]{0}', space=vmem, size = 0x10000, scoped, tag = 'input window, operand 3, single buffered']
    #allocation9 [shape = 'u8[8192]{0}', space=vmem, size = 0x2000, scoped, tag = 'output window, operand 0, single buffered']
    %10 = vsyncpa [#allocation4], 0
    %11 = vsyncpa [#allocation7], 0
    %12 = vsyncpa [#allocation5], 0
    // Predicated region
    $region2: #{tpu_custom_call.1} parent=1 // pred_check
      _
    $region3: #{tpu_custom_call.1} parent=1 // pred_check_branch
      %14 = sbr.rel (0) target = $region5
    $region4: #{tpu_custom_call.1} parent=1 // pred_region
      %s16 = ssub.s32 256, 256
      %17 = vsyncadd [#allocation4], %s16
      %s18 = sshll.u32 [#allocation3], 4
      %s19 = int_to_ptr.vmem [resolvable:$true] %s18
      %24 = dma.hbm_to_vmem [thread:$0]  %s0, 256, %s19, [#allocation4], 32, 32, 2
    $region5: #{tpu_custom_call.1} parent=1 // pred_fallthru
      _
    // Predicated region
    $region6: #{tpu_custom_call.1} parent=1 // pred_check
      _
    $region7: #{tpu_custom_call.1} parent=1 // pred_check_branch
      %26 = sbr.rel (0) target = $region9
    $region8: #{tpu_custom_call.1} parent=1 // pred_region
      %s28 = ssub.s32 512, 512
      %29 = vsyncadd [#allocation7], %s28
      %s30 = sshll.u32 [#allocation6], 4
      %s31 = int_to_ptr.vmem [resolvable:$true] %s30
      %36 = dma.hbm_to_vmem [thread:$0]  %s1, 512, %s31, [#allocation7], 256, 256, 16
    $region9: #{tpu_custom_call.1} parent=1 // pred_fallthru
      _
    // Predicated region
    $region10: #{tpu_custom_call.1} parent=1 // pred_check
      _
    $region11: #{tpu_custom_call.1} parent=1 // pred_check_branch
      %38 = sbr.rel (0) target = $region13
    $region12: #{tpu_custom_call.1} parent=1 // pred_region
      _
    $region13: #{tpu_custom_call.1} parent=1 // pred_fallthru
      _
    // Predicated region
    $region14: #{tpu_custom_call.1} parent=1 // pred_check
      _
    $region15: #{tpu_custom_call.1} parent=1 // pred_check_branch
      %40 = sbr.rel (0) target = $region17
    $region16: #{tpu_custom_call.1} parent=1 // pred_region
      %s42 = ssub.s32 2048, 2048
      %43 = vsyncadd [#allocation7], %s42
      %s44 = sshll.u32 [#allocation8], 4
      %s45 = int_to_ptr.vmem [resolvable:$true] %s44
      %50 = dma.hbm_to_vmem [thread:$0]  %s3, 2048, %s45, [#allocation7], 256, 256, 16
    $region17: #{tpu_custom_call.1} parent=1 // pred_fallthru
      _
    // Predicated region
    $region18: #{tpu_custom_call.1} parent=1 // pred_check
      _
    $region19: #{tpu_custom_call.1} parent=1 // pred_check_branch
      %52 = sbr.rel (0) target = $region21
    $region20: #{tpu_custom_call.1} parent=1 // pred_region
      _
    $region21: #{tpu_custom_call.1} parent=1 // pred_fallthru
      _
    // Predicated region
    $region22: #{tpu_custom_call.1} parent=1 // pred_check
      _
    $region23: #{tpu_custom_call.1} parent=1 // pred_check_branch
      %54 = sbr.rel (0) target = $region25
    $region24: #{tpu_custom_call.1} parent=1 // pred_region
      %55 = dma.done [#allocation4], 256
    $region25: #{tpu_custom_call.1} parent=1 // pred_fallthru
      _
    // Predicated region
    $region26: #{tpu_custom_call.1} parent=1 // pred_check
      _
    $region27: #{tpu_custom_call.1} parent=1 // pred_check_branch
      %57 = sbr.rel (0) target = $region29
    $region28: #{tpu_custom_call.1} parent=1 // pred_region
      %58 = dma.done [#allocation7], 512
    $region29: #{tpu_custom_call.1} parent=1 // pred_fallthru
      _
    // Predicated region
    $region30: #{tpu_custom_call.1} parent=1 // pred_check
      _
    $region31: #{tpu_custom_call.1} parent=1 // pred_check_branch
      %60 = sbr.rel (0) target = $region33
    $region32: #{tpu_custom_call.1} parent=1 // pred_region
      %61 = dma.done [#allocation7], 2048
    $region33: #{tpu_custom_call.1} parent=1 // pred_fallthru
      _
    %v62 = vld [vmem:[#allocation3] sm:$0x3]
    %v63 = vld [vmem:[#allocation3 + $0x2] sm:$0x3]
    %v64 = vld [vmem:[#allocation3 + $0x4] sm:$0x3]
    %v65 = vld [vmem:[#allocation3 + $0x6] sm:$0x3]
    %v66 = vld [vmem:[#allocation3 + $0x8] sm:$0x3]
    %v67 = vld [vmem:[#allocation3 + $0xa] sm:$0x3]
    %v68 = vld [vmem:[#allocation3 + $0xc] sm:$0x3]
    %v69 = vld [vmem:[#allocation3 + $0xe] sm:$0x3]
    %v70 = vld [vmem:[#allocation6] sm:$0xff]
    %v71 = vld [vmem:[#allocation6 + $0x8] sm:$0xff]
    %v72 = vld [vmem:[#allocation6 + $0x10] sm:$0xff]
    %v73 = vld [vmem:[#allocation6 + $0x18] sm:$0xff]
    %v74 = vld [vmem:[%s2] sm:$0x3]
    %v76 = vlaneseq
    %v77 = vshrl.u32 %v76, 7
    %v78 = vsub.s32 0, %v77
    %v79 = vrot.slane %v74, %v78
    %v80 = vlaneseq
    %v81 = vshrl.u32 %v80, 7
    %v82 = vsub.s32 1, %v81
    %v83 = vrot.slane %v74, %v82
    %v94 = vcombine.low %v62, %v63
    %v95 = vcombine.low %v64, %v65
    %v97 = vunpack.c.l.s4 1983009808
    %v98 = vunpack.c.0.s8 %v97
    %v99 = vlaneseq
    %v100 = vshrl.u32 %v99, 7
    %v101 = vsub.s32 %v98, %v100
    %v102 = vrot.slane %v94, %v101
    %v104 = vunpack.c.l.s4 1983009808
    %v105 = vunpack.c.0.s8 %v104
    %v106 = vlaneseq
    %v107 = vshrl.u32 %v106, 7
    %v108 = vsub.s32 %v105, %v107
    %v109 = vrot.slane %v95, %v108
    %v110 = vcombine.low %v102, %v109
    %v111 = vcombine.low %v66, %v67
    %v112 = vcombine.low %v68, %v69
    %v114 = vunpack.c.l.s4 1983009808
    %v115 = vunpack.c.0.s8 %v114
    %v116 = vlaneseq
    %v117 = vshrl.u32 %v116, 7
    %v118 = vsub.s32 %v115, %v117
    %v119 = vrot.slane %v111, %v118
    %v121 = vunpack.c.l.s4 1983009808
    %v122 = vunpack.c.0.s8 %v121
    %v123 = vlaneseq
    %v124 = vshrl.u32 %v123, 7
    %v125 = vsub.s32 %v122, %v124
    %v126 = vrot.slane %v112, %v125
    %v127 = vcombine.low %v119, %v126
    %vm128 = vcmask 130048
    %v129 = vsel %vm128, %v110, 0
    %v131 = vsel %vm128, %v127, 0
    %133 = vmatprep.subr.mxu0 %v71
    %134 = vmatpush1.msra.mxu0 %v70
    %135 = vmatprep.subr.mxu0 %v73
    %136 = vmatpush1.msra.mxu0 %v72
    %137 = vmatprep.subr.mxu0 0.0
    %138 = vmatpush1.msra.mxu0 0.0
    %139 = vmatprep.subr.mxu0 0.0
    %140 = vmatpush1.msra.mxu0 0.0
    %141 = vmatprep.subr.mxu0 0.0
    %142 = vmatpush1.msra.mxu0 0.0
    %143 = vmatprep.subr.mxu0 0.0
    %144 = vmatpush1.msra.mxu0 0.0
    %145 = vmatprep.subr.mxu0 0.0
    %146 = vmatpush1.msra.mxu0 0.0
    %147 = vmatprep.subr.mxu0 0.0
    %148 = vmatpush1.msra.mxu0 0.0
    %149 = vmatprep.subr.mxu0 0.0
    %150 = vmatpush1.msra.mxu0 0.0
    %151 = vmatprep.subr.mxu0 0.0
    %152 = vmatpush1.msra.mxu0 0.0
    %153 = vmatprep.subr.mxu0 0.0
    %154 = vmatpush1.msra.mxu0 0.0
    %155 = vmatprep.subr.mxu0 0.0
    %156 = vmatpush1.msra.mxu0 0.0
    %157 = vmatprep.subr.mxu0 0.0
    %158 = vmatpush1.msra.mxu0 0.0
    %159 = vmatprep.subr.mxu0 0.0
    %160 = vmatpush1.msra.mxu0 0.0
    %161 = vmatprep.subr.mxu0 0.0
    %162 = vmatpush1.msra.mxu0 0.0
    %163 = vmatprep.subr.mxu0 0.0
    %164 = vmatpush1.msra.mxu0 0.0
    %165 = vmatprep.subr.mxu0 0.0
    %166 = vmatpush1.msra.mxu0 0.0
    %167 = vmatprep.subr.mxu0 0.0
    %168 = vmatpush1.msra.mxu0 0.0
    %169 = vmatprep.subr.mxu0 0.0
    %170 = vmatpush1.msra.mxu0 0.0
    %171 = vmatprep.subr.mxu0 0.0
    %172 = vmatpush1.msra.mxu0 0.0
    %173 = vmatprep.subr.mxu0 0.0
    %174 = vmatpush1.msra.mxu0 0.0
    %175 = vmatprep.subr.mxu0 0.0
    %176 = vmatpush1.msra.mxu0 0.0
    %177 = vmatprep.subr.mxu0 0.0
    %178 = vmatpush1.msra.mxu0 0.0
    %179 = vmatprep.subr.mxu0 0.0
    %180 = vmatpush1.msra.mxu0 0.0
    %181 = vmatprep.subr.mxu0 0.0
    %182 = vmatpush1.msra.mxu0 0.0
    %183 = vmatprep.subr.mxu0 0.0
    %184 = vmatpush1.msra.mxu0 0.0
    %185 = vmatprep.subr.mxu0 0.0
    %186 = vmatpush1.msra.mxu0 0.0
    %187 = vmatprep.subr.mxu0 0.0
    %188 = vmatpush1.msra.mxu0 0.0
    %189 = vmatprep.subr.mxu0 0.0
    %190 = vmatpush1.msra.mxu0 0.0
    %191 = vmatprep.subr.mxu0 0.0
    %192 = vmatpush1.msra.mxu0 0.0
    %193 = vmatprep.subr.mxu0 0.0
    %194 = vmatpush1.msra.mxu0 0.0
    %195 = vmatprep.subr.mxu0 0.0
    %196 = vmatpush1.msra.mxu0 0.0
    %197 = vmatprep.mubr.f32.mxu0 0.0
    %198 = vmatmul.mubr.f32.gmra.mrb[0].mxu0 %v129
    %v199 = vpop.f32.mrb[0].mxu0
    %v200 = vadd.f32 %v79, %v199
    %v201 = vpop.f32.mrb[0].mxu0
    %v202 = vadd.f32 %v83, %v201
    %203 = vmatprep.mubr.f32.mxu0 0.0
    %204 = vmatmul.mubr.f32.gmra.mrb[0].mxu0 %v131
    %v205 = vpop.f32.mrb[0].mxu0
    %v206 = vadd.f32 %v79, %v205
    %v207 = vpop.f32.mrb[0].mxu0
    %v208 = vadd.f32 %v83, %v207
    %209 = vdwg.mxu0
    %v214 = vcombine.low %v200, %v202
    %v215 = vcombine.high %v200, %v202
    %v217 = vunpack.c.l.s4 1983009808
    %v218 = vunpack.c.0.s8 %v217
    %v219 = vlaneseq
    %v220 = vshrl.u32 %v219, 7
    %v221 = vsub.s32 %v218, %v220
    %v222 = vrot.slane %v214, %v221
    %v224 = vunpack.c.l.s4 1983009808
    %v225 = vunpack.c.0.s8 %v224
    %v226 = vlaneseq
    %v227 = vshrl.u32 %v226, 7
    %v228 = vsub.s32 %v225, %v227
    %v229 = vrot.slane %v215, %v228
    %v230 = vcombine.high %v222, %v222
    %v231 = vcombine.high %v229, %v229
    %v232 = vcombine.low %v206, %v208
    %v233 = vcombine.high %v206, %v208
    %v235 = vunpack.c.l.s4 1983009808
    %v236 = vunpack.c.0.s8 %v235
    %v237 = vlaneseq
    %v238 = vshrl.u32 %v237, 7
    %v239 = vsub.s32 %v236, %v238
    %v240 = vrot.slane %v232, %v239
    %v242 = vunpack.c.l.s4 1983009808
    %v243 = vunpack.c.0.s8 %v242
    %v244 = vlaneseq
    %v245 = vshrl.u32 %v244, 7
    %v246 = vsub.s32 %v243, %v245
    %v247 = vrot.slane %v233, %v246
    %v248 = vcombine.high %v240, %v240
    %v249 = vcombine.high %v247, %v247
    %vm258 = vcmask 1041408
    %vm259 = vcmask 519170
    %vm260 = vmor %vm259, %vm258
    %261 = vst.msk [vmem:[#allocation2] sm:$0xf] %vm260, %v222
    %262 = vst.msk [vmem:[#allocation2 + $0x4] sm:$0xf] %vm260, %v230
    %263 = vst.msk [vmem:[#allocation2 + $0x8] sm:$0xf] %vm260, %v229
    %264 = vst.msk [vmem:[#allocation2 + $0xc] sm:$0xf] %vm260, %v231
    %265 = vst.msk [vmem:[#allocation2 + $0x10] sm:$0xf] %vm260, %v240
    %266 = vst.msk [vmem:[#allocation2 + $0x14] sm:$0xf] %vm260, %v248
    %267 = vst.msk [vmem:[#allocation2 + $0x18] sm:$0xf] %vm260, %v247
    %268 = vst.msk [vmem:[#allocation2 + $0x1c] sm:$0xf] %vm260, %v249
    %v269 = vld [vmem:[#allocation8] sm:$0xff]
    %v270 = vld [vmem:[#allocation8 + $0x8] sm:$0xff]
    %v271 = vld [vmem:[#allocation8 + $0x10] sm:$0xff]
    %v272 = vld [vmem:[#allocation8 + $0x18] sm:$0xff]
    %v273 = vld [vmem:[#allocation8 + $0x20] sm:$0xff]
    %v274 = vld [vmem:[#allocation8 + $0x28] sm:$0xff]
    %v275 = vld [vmem:[#allocation8 + $0x30] sm:$0xff]
    %v276 = vld [vmem:[#allocation8 + $0x38] sm:$0xff]
    %v277 = vld [vmem:[#allocation8 + $0x40] sm:$0xff]
    %v278 = vld [vmem:[#allocation8 + $0x48] sm:$0xff]
    %v279 = vld [vmem:[#allocation8 + $0x50] sm:$0xff]
    %v280 = vld [vmem:[#allocation8 + $0x58] sm:$0xff]
    %v281 = vld [vmem:[#allocation8 + $0x60] sm:$0xff]
    %v282 = vld [vmem:[#allocation8 + $0x68] sm:$0xff]
    %v283 = vld [vmem:[#allocation8 + $0x70] sm:$0xff]
    %v284 = vld [vmem:[#allocation8 + $0x78] sm:$0xff]
    %v285 = vld [vmem:[%s4] sm:$0x3]
    %v287 = vlaneseq
    %v288 = vshrl.u32 %v287, 7
    %v289 = vsub.s32 0, %v288
    %v290 = vrot.slane %v285, %v289
    %v291 = vlaneseq
    %v292 = vshrl.u32 %v291, 7
    %v293 = vsub.s32 1, %v292
    %v294 = vrot.slane %v285, %v293
    %vm297 = vcmask 523264
    %v299 = vsel %vm297, 0.0, 0
    %301 = vmatprep.subr.mxu0 %v270
    %302 = vmatpush1.msra.mxu0 %v269
    %303 = vmatprep.subr.mxu0 %v272
    %304 = vmatpush1.msra.mxu0 %v271
    %305 = vmatprep.subr.mxu0 %v274
    %306 = vmatpush1.msra.mxu0 %v273
    %307 = vmatprep.subr.mxu0 %v276
    %308 = vmatpush1.msra.mxu0 %v275
    %309 = vmatprep.subr.mxu0 %v278
    %310 = vmatpush1.msra.mxu0 %v277
    %311 = vmatprep.subr.mxu0 %v280
    %312 = vmatpush1.msra.mxu0 %v279
    %313 = vmatprep.subr.mxu0 %v282
    %314 = vmatpush1.msra.mxu0 %v281
    %315 = vmatprep.subr.mxu0 %v284
    %316 = vmatpush1.msra.mxu0 %v283
    %317 = vmatprep.subr.mxu0 0.0
    %318 = vmatpush1.msra.mxu0 0.0
    %319 = vmatprep.subr.mxu0 0.0
    %320 = vmatpush1.msra.mxu0 0.0
    %321 = vmatprep.subr.mxu0 0.0
    %322 = vmatpush1.msra.mxu0 0.0
    %323 = vmatprep.subr.mxu0 0.0
    %324 = vmatpush1.msra.mxu0 0.0
    %325 = vmatprep.subr.mxu0 0.0
    %326 = vmatpush1.msra.mxu0 0.0
    %327 = vmatprep.subr.mxu0 0.0
    %328 = vmatpush1.msra.mxu0 0.0
    %329 = vmatprep.subr.mxu0 0.0
    %330 = vmatpush1.msra.mxu0 0.0
    %331 = vmatprep.subr.mxu0 0.0
    %332 = vmatpush1.msra.mxu0 0.0
    %333 = vmatprep.subr.mxu0 0.0
    %334 = vmatpush1.msra.mxu0 0.0
    %335 = vmatprep.subr.mxu0 0.0
    %336 = vmatpush1.msra.mxu0 0.0
    %337 = vmatprep.subr.mxu0 0.0
    %338 = vmatpush1.msra.mxu0 0.0
    %339 = vmatprep.subr.mxu0 0.0
    %340 = vmatpush1.msra.mxu0 0.0
    %341 = vmatprep.subr.mxu0 0.0
    %342 = vmatpush1.msra.mxu0 0.0
    %343 = vmatprep.subr.mxu0 0.0
    %344 = vmatpush1.msra.mxu0 0.0
    %345 = vmatprep.subr.mxu0 0.0
    %346 = vmatpush1.msra.mxu0 0.0
    %347 = vmatprep.subr.mxu0 0.0
    %348 = vmatpush1.msra.mxu0 0.0
    %349 = vmatprep.subr.mxu0 0.0
    %350 = vmatpush1.msra.mxu0 0.0
    %351 = vmatprep.subr.mxu0 0.0
    %352 = vmatpush1.msra.mxu0 0.0
    %353 = vmatprep.subr.mxu0 0.0
    %354 = vmatpush1.msra.mxu0 0.0
    %355 = vmatprep.subr.mxu0 0.0
    %356 = vmatpush1.msra.mxu0 0.0
    %357 = vmatprep.subr.mxu0 0.0
    %358 = vmatpush1.msra.mxu0 0.0
    %359 = vmatprep.subr.mxu0 0.0
    %360 = vmatpush1.msra.mxu0 0.0
    %361 = vmatprep.subr.mxu0 0.0
    %362 = vmatpush1.msra.mxu0 0.0
    %363 = vmatprep.subr.mxu0 0.0
    %364 = vmatpush1.msra.mxu0 0.0
    %365 = vmatprep.mubr.f32.mxu0 0.0
    %366 = vmatmul.mubr.f32.gmra.mrb[0].mxu0 %v299
    %v367 = vpop.f32.mrb[0].mxu0
    %v368 = vadd.f32 %v290, %v367
    %v369 = vpop.f32.mrb[0].mxu0
    %v370 = vadd.f32 %v294, %v369
    %371 = vdwg.mxu0
    %v372 = vld [vmem:[#allocation2] sm:$0x3]
    %v373 = vadd.f32 %v372, %v368
    %v374 = vxor.u32 %v373, 2147483648
    %v375 = vmul.f32 %v374, 1.442695
    %v376 = vpow.pop %v375
    %v377 = vadd.f32 %v376, 1.0
    %v378 = vrcp.pop %v377
    %v379 = vmul.f32 1.0, %v378
    %v382 = vunpack.c.l.s4 1983009808
    %v383 = vunpack.c.0.s8 %v382
    %v384 = vlaneseq
    %v385 = vshrl.u32 %v384, 7
    %v386 = vsub.s32 %v383, %v385
    %v387 = vrot.slane %v368, %v386
    %388 = vrot.lane.b32.xlu0 %v387, 64
    %v389 = vpop.permute.xlu0 %388
    %v391 = vmul.f32 %v379, %v389
    %393 = vrot.lane.b32.xlu0 %v391, 64
    %v394 = vpop.permute.xlu0 %393
    %v396 = vadd.f32 %v372, %v394
    %v397 = vtanh.pop %v396
    %v398 = vsub.f32 1.0, %v379
    %400 = vrot.lane.b32.xlu0 %v397, 96
    %v401 = vpop.permute.xlu0 %400
    %v403 = vmul.f32 %v398, %v401
    %v404 = vmul.f32 %v379, 0.0
    %v405 = vadd.f32 %v403, %v404
    %v408 = vunpack.c.l.s4 1983009808
    %v409 = vunpack.c.0.s8 %v408
    %v410 = vlaneseq
    %v411 = vshrl.u32 %v410, 7
    %v412 = vsub.s32 %v409, %v411
    %v413 = vrot.slane %v405, %v412
    %414 = vrot.lane.b32.xlu0 %v413, 96
    %v415 = vpop.permute.xlu0 %414
    %vm417 = vcmask 254976
    %418 = vst.msk [vmem:[#allocation9] sm:$0x3] %vm417, %v415
    %s419 = scalar_lea.vmem [#allocation2], 28
    %v420 = vld [vmem:[%s419] sm:$0xf]
    %v422 = vcombine.low %v368, %v370
    %v424 = vunpack.c.l.s4 1983009808
    %v425 = vunpack.c.0.s8 %v424
    %v426 = vlaneseq
    %v427 = vshrl.u32 %v426, 7
    %v428 = vsub.s32 %v425, %v427
    %v429 = vrot.slane %v422, %v428
    %v431 = vadd.f32 %v420, %v429
    %v432 = vxor.u32 %v431, 2147483648
    %v433 = vmul.f32 %v432, 1.442695
    %v434 = vpow.pop %v433
    %v435 = vadd.f32 %v434, 1.0
    %v436 = vrcp.pop %v435
    %v437 = vmul.f32 1.0, %v436
    %v439 = vunpack.c.l.s4 1983009808
    %v440 = vunpack.c.0.s8 %v439
    %v441 = vlaneseq
    %v442 = vshrl.u32 %v441, 7
    %v443 = vsub.s32 %v440, %v442
    %v444 = vrot.slane %v370, %v443
    %445 = vrot.lane.b32.xlu0 %v444, 64
    %v446 = vpop.permute.xlu0 %445
    %v448 = vmul.f32 %v437, %v446
    %450 = vrot.lane.b32.xlu0 %v420, 96
    %v451 = vpop.permute.xlu0 %450
    %v452 = vrot.slane %v451, 2
    %455 = vrot.lane.b32.xlu0 %v448, 32
    %v456 = vpop.permute.xlu0 %455
    %v458 = vadd.f32 %v452, %v456
    %v459 = vtanh.pop %v458
    %v461 = vrot.slane %v437, 2
    %v463 = vsub.f32 1.0, %v461
    %v464 = vmul.f32 %v463, %v459
    %v465 = vmul.f32 %v461, 0.0
    %v466 = vadd.f32 %v464, %v465
    %v469 = vunpack.c.l.s4 1983009808
    %v470 = vunpack.c.0.s8 %v469
    %v471 = vlaneseq
    %v472 = vshrl.u32 %v471, 7
    %v473 = vsub.s32 %v470, %v472
    %v474 = vrot.slane %v466, %v473
    %475 = vrot.lane.b32.xlu0 %v474, 32
    %v476 = vpop.permute.xlu0 %475
    %s478 = scalar_lea.vmem [#allocation9], 14
    %vm479 = vcmask 517376
    %480 = vst.msk [vmem:[%s478] sm:$0x3] %vm479, %v476
    %vm481 = vcmask 261120
    %v482 = vsel %vm481, %v415, %v476
    %v484 = vsel %vm297, %v482, 0
    %486 = vmatprep.subr.mxu0 %v270
    %487 = vmatpush1.msra.mxu0 %v269
    %488 = vmatprep.subr.mxu0 %v272
    %489 = vmatpush1.msra.mxu0 %v271
    %490 = vmatprep.subr.mxu0 %v274
    %491 = vmatpush1.msra.mxu0 %v273
    %492 = vmatprep.subr.mxu0 %v276
    %493 = vmatpush1.msra.mxu0 %v275
    %494 = vmatprep.subr.mxu0 %v278
    %495 = vmatpush1.msra.mxu0 %v277
    %496 = vmatprep.subr.mxu0 %v280
    %497 = vmatpush1.msra.mxu0 %v279
    %498 = vmatprep.subr.mxu0 %v282
    %499 = vmatpush1.msra.mxu0 %v281
    %500 = vmatprep.subr.mxu0 %v284
    %501 = vmatpush1.msra.mxu0 %v283
    %502 = vmatprep.subr.mxu0 0.0
    %503 = vmatpush1.msra.mxu0 0.0
    %504 = vmatprep.subr.mxu0 0.0
    %505 = vmatpush1.msra.mxu0 0.0
    %506 = vmatprep.subr.mxu0 0.0
    %507 = vmatpush1.msra.mxu0 0.0
    %508 = vmatprep.subr.mxu0 0.0
    %509 = vmatpush1.msra.mxu0 0.0
    %510 = vmatprep.subr.mxu0 0.0
    %511 = vmatpush1.msra.mxu0 0.0
    %512 = vmatprep.subr.mxu0 0.0
    %513 = vmatpush1.msra.mxu0 0.0
    %514 = vmatprep.subr.mxu0 0.0
    %515 = vmatpush1.msra.mxu0 0.0
    %516 = vmatprep.subr.mxu0 0.0
    %517 = vmatpush1.msra.mxu0 0.0
    %518 = vmatprep.subr.mxu0 0.0
    %519 = vmatpush1.msra.mxu0 0.0
    %520 = vmatprep.subr.mxu0 0.0
    %521 = vmatpush1.msra.mxu0 0.0
    %522 = vmatprep.subr.mxu0 0.0
    %523 = vmatpush1.msra.mxu0 0.0
    %524 = vmatprep.subr.mxu0 0.0
    %525 = vmatpush1.msra.mxu0 0.0
    %526 = vmatprep.subr.mxu0 0.0
    %527 = vmatpush1.msra.mxu0 0.0
    %528 = vmatprep.subr.mxu0 0.0
    %529 = vmatpush1.msra.mxu0 0.0
    %530 = vmatprep.subr.mxu0 0.0
    %531 = vmatpush1.msra.mxu0 0.0
    %532 = vmatprep.subr.mxu0 0.0
    %533 = vmatpush1.msra.mxu0 0.0
    %534 = vmatprep.subr.mxu0 0.0
    %535 = vmatpush1.msra.mxu0 0.0
    %536 = vmatprep.subr.mxu0 0.0
    %537 = vmatpush1.msra.mxu0 0.0
    %538 = vmatprep.subr.mxu0 0.0
    %539 = vmatpush1.msra.mxu0 0.0
    %540 = vmatprep.subr.mxu0 0.0
    %541 = vmatpush1.msra.mxu0 0.0
    %542 = vmatprep.subr.mxu0 0.0
    %543 = vmatpush1.msra.mxu0 0.0
    %544 = vmatprep.subr.mxu0 0.0
    %545 = vmatpush1.msra.mxu0 0.0
    %546 = vmatprep.subr.mxu0 0.0
    %547 = vmatpush1.msra.mxu0 0.0
    %548 = vmatprep.subr.mxu0 0.0
    %549 = vmatpush1.msra.mxu0 0.0
    %550 = vmatprep.mubr.f32.mxu0 0.0
    %551 = vmatmul.mubr.f32.gmra.mrb[0].mxu0 %v484
    %v552 = vpop.f32.mrb[0].mxu0
    %v553 = vadd.f32 %v290, %v552
    %v554 = vpop.f32.mrb[0].mxu0
    %v555 = vadd.f32 %v294, %v554
    %556 = vdwg.mxu0
    %s557 = scalar_lea.vmem [#allocation2], 4
    %v558 = vld [vmem:[%s557] sm:$0x3]
    %v559 = vadd.f32 %v558, %v553
    %v560 = vxor.u32 %v559, 2147483648
    %v561 = vmul.f32 %v560, 1.442695
    %v562 = vpow.pop %v561
    %v563 = vadd.f32 %v562, 1.0
    %v564 = vrcp.pop %v563
    %v565 = vmul.f32 1.0, %v564
    %v568 = vunpack.c.l.s4 1983009808
    %v569 = vunpack.c.0.s8 %v568
    %v570 = vlaneseq
    %v571 = vshrl.u32 %v570, 7
    %v572 = vsub.s32 %v569, %v571
    %v573 = vrot.slane %v553, %v572
    %574 = vrot.lane.b32.xlu0 %v573, 64
    %v575 = vpop.permute.xlu0 %574
    %v577 = vmul.f32 %v565, %v575
    %579 = vrot.lane.b32.xlu0 %v577, 64
    %v580 = vpop.permute.xlu0 %579
    %v582 = vadd.f32 %v558, %v580
    %v583 = vtanh.pop %v582
    %v584 = vsub.f32 1.0, %v565
    %586 = vrot.lane.b32.xlu0 %v583, 96
    %v587 = vpop.permute.xlu0 %586
    %v589 = vmul.f32 %v584, %v587
    %v591 = vunpack.c.l.s4 1983009808
    %v592 = vunpack.c.0.s8 %v591
    %v593 = vlaneseq
    %v594 = vshrl.u32 %v593, 7
    %v595 = vsub.s32 %v592, %v594
    %v596 = vrot.slane %v482, %v595
    %597 = vrot.lane.b32.xlu0 %v596, 32
    %v598 = vpop.permute.xlu0 %597
    %v600 = vmul.f32 %v565, %v598
    %v601 = vadd.f32 %v589, %v600
    %v604 = vunpack.c.l.s4 1983009808
    %v605 = vunpack.c.0.s8 %v604
    %v606 = vlaneseq
    %v607 = vshrl.u32 %v606, 7
    %v608 = vsub.s32 %v605, %v607
    %v609 = vrot.slane %v601, %v608
    %610 = vrot.lane.b32.xlu0 %v609, 96
    %v611 = vpop.permute.xlu0 %610
    %s613 = scalar_lea.vmem [#allocation9], 2
    %614 = vst.msk [vmem:[%s613] sm:$0x3] %vm417, %v611
    %s615 = scalar_lea.vmem [#allocation2], 24
    %v616 = vld [vmem:[%s615] sm:$0xf]
    %v618 = vcombine.low %v553, %v555
    %v620 = vunpack.c.l.s4 1983009808
    %v621 = vunpack.c.0.s8 %v620
    %v622 = vlaneseq
    %v623 = vshrl.u32 %v622, 7
    %v624 = vsub.s32 %v621, %v623
    %v625 = vrot.slane %v618, %v624
    %v627 = vadd.f32 %v616, %v625
    %v628 = vxor.u32 %v627, 2147483648
    %v629 = vmul.f32 %v628, 1.442695
    %v630 = vpow.pop %v629
    %v631 = vadd.f32 %v630, 1.0
    %v632 = vrcp.pop %v631
    %v633 = vmul.f32 1.0, %v632
    %v635 = vunpack.c.l.s4 1983009808
    %v636 = vunpack.c.0.s8 %v635
    %v637 = vlaneseq
    %v638 = vshrl.u32 %v637, 7
    %v639 = vsub.s32 %v636, %v638
    %v640 = vrot.slane %v555, %v639
    %641 = vrot.lane.b32.xlu0 %v640, 64
    %v642 = vpop.permute.xlu0 %641
    %v644 = vmul.f32 %v633, %v642
    %646 = vrot.lane.b32.xlu0 %v616, 96
    %v647 = vpop.permute.xlu0 %646
    %v648 = vrot.slane %v647, 2
    %651 = vrot.lane.b32.xlu0 %v644, 32
    %v652 = vpop.permute.xlu0 %651
    %v654 = vadd.f32 %v648, %v652
    %v655 = vtanh.pop %v654
    %v657 = vrot.slane %v633, 2
    %v659 = vsub.f32 1.0, %v657
    %v660 = vmul.f32 %v659, %v655
    %661 = vrot.lane.b32.xlu0 %v596, 96
    %v662 = vpop.permute.xlu0 %661
    %v664 = vmul.f32 %v657, %v662
    %v665 = vadd.f32 %v660, %v664
    %v668 = vunpack.c.l.s4 1983009808
    %v669 = vunpack.c.0.s8 %v668
    %v670 = vlaneseq
    %v671 = vshrl.u32 %v670, 7
    %v672 = vsub.s32 %v669, %v671
    %v673 = vrot.slane %v665, %v672
    %674 = vrot.lane.b32.xlu0 %v673, 32
    %v675 = vpop.permute.xlu0 %674
    %s677 = scalar_lea.vmem [#allocation9], 12
    %678 = vst.msk [vmem:[%s677] sm:$0x3] %vm479, %v675
    %v679 = vsel %vm481, %v611, %v675
    %v681 = vsel %vm297, %v679, 0
    %683 = vmatprep.subr.mxu0 %v270
    %684 = vmatpush1.msra.mxu0 %v269
    %685 = vmatprep.subr.mxu0 %v272
    %686 = vmatpush1.msra.mxu0 %v271
    %687 = vmatprep.subr.mxu0 %v274
    %688 = vmatpush1.msra.mxu0 %v273
    %689 = vmatprep.subr.mxu0 %v276
    %690 = vmatpush1.msra.mxu0 %v275
    %691 = vmatprep.subr.mxu0 %v278
    %692 = vmatpush1.msra.mxu0 %v277
    %693 = vmatprep.subr.mxu0 %v280
    %694 = vmatpush1.msra.mxu0 %v279
    %695 = vmatprep.subr.mxu0 %v282
    %696 = vmatpush1.msra.mxu0 %v281
    %697 = vmatprep.subr.mxu0 %v284
    %698 = vmatpush1.msra.mxu0 %v283
    %699 = vmatprep.subr.mxu0 0.0
    %700 = vmatpush1.msra.mxu0 0.0
    %701 = vmatprep.subr.mxu0 0.0
    %702 = vmatpush1.msra.mxu0 0.0
    %703 = vmatprep.subr.mxu0 0.0
    %704 = vmatpush1.msra.mxu0 0.0
    %705 = vmatprep.subr.mxu0 0.0
    %706 = vmatpush1.msra.mxu0 0.0
    %707 = vmatprep.subr.mxu0 0.0
    %708 = vmatpush1.msra.mxu0 0.0
    %709 = vmatprep.subr.mxu0 0.0
    %710 = vmatpush1.msra.mxu0 0.0
    %711 = vmatprep.subr.mxu0 0.0
    %712 = vmatpush1.msra.mxu0 0.0
    %713 = vmatprep.subr.mxu0 0.0
    %714 = vmatpush1.msra.mxu0 0.0
    %715 = vmatprep.subr.mxu0 0.0
    %716 = vmatpush1.msra.mxu0 0.0
    %717 = vmatprep.subr.mxu0 0.0
    %718 = vmatpush1.msra.mxu0 0.0
    %719 = vmatprep.subr.mxu0 0.0
    %720 = vmatpush1.msra.mxu0 0.0
    %721 = vmatprep.subr.mxu0 0.0
    %722 = vmatpush1.msra.mxu0 0.0
    %723 = vmatprep.subr.mxu0 0.0
    %724 = vmatpush1.msra.mxu0 0.0
    %725 = vmatprep.subr.mxu0 0.0
    %726 = vmatpush1.msra.mxu0 0.0
    %727 = vmatprep.subr.mxu0 0.0
    %728 = vmatpush1.msra.mxu0 0.0
    %729 = vmatprep.subr.mxu0 0.0
    %730 = vmatpush1.msra.mxu0 0.0
    %731 = vmatprep.subr.mxu0 0.0
    %732 = vmatpush1.msra.mxu0 0.0
    %733 = vmatprep.subr.mxu0 0.0
    %734 = vmatpush1.msra.mxu0 0.0
    %735 = vmatprep.subr.mxu0 0.0
    %736 = vmatpush1.msra.mxu0 0.0
    %737 = vmatprep.subr.mxu0 0.0
    %738 = vmatpush1.msra.mxu0 0.0
    %739 = vmatprep.subr.mxu0 0.0
    %740 = vmatpush1.msra.mxu0 0.0
    %741 = vmatprep.subr.mxu0 0.0
    %742 = vmatpush1.msra.mxu0 0.0
    %743 = vmatprep.subr.mxu0 0.0
    %744 = vmatpush1.msra.mxu0 0.0
    %745 = vmatprep.subr.mxu0 0.0
    %746 = vmatpush1.msra.mxu0 0.0
    %747 = vmatprep.mubr.f32.mxu0 0.0
    %748 = vmatmul.mubr.f32.gmra.mrb[0].mxu0 %v681
    %v749 = vpop.f32.mrb[0].mxu0
    %v750 = vadd.f32 %v290, %v749
    %v751 = vpop.f32.mrb[0].mxu0
    %v752 = vadd.f32 %v294, %v751
    %753 = vdwg.mxu0
    %s754 = scalar_lea.vmem [#allocation2], 8
    %v755 = vld [vmem:[%s754] sm:$0x3]
    %v756 = vadd.f32 %v755, %v750
    %v757 = vxor.u32 %v756, 2147483648
    %v758 = vmul.f32 %v757, 1.442695
    %v759 = vpow.pop %v758
    %v760 = vadd.f32 %v759, 1.0
    %v761 = vrcp.pop %v760
    %v762 = vmul.f32 1.0, %v761
    %v765 = vunpack.c.l.s4 1983009808
    %v766 = vunpack.c.0.s8 %v765
    %v767 = vlaneseq
    %v768 = vshrl.u32 %v767, 7
    %v769 = vsub.s32 %v766, %v768
    %v770 = vrot.slane %v750, %v769
    %771 = vrot.lane.b32.xlu0 %v770, 64
    %v772 = vpop.permute.xlu0 %771
    %v774 = vmul.f32 %v762, %v772
    %776 = vrot.lane.b32.xlu0 %v774, 64
    %v777 = vpop.permute.xlu0 %776
    %v779 = vadd.f32 %v755, %v777
    %v780 = vtanh.pop %v779
    %v781 = vsub.f32 1.0, %v762
    %783 = vrot.lane.b32.xlu0 %v780, 96
    %v784 = vpop.permute.xlu0 %783
    %v786 = vmul.f32 %v781, %v784
    %v788 = vunpack.c.l.s4 1983009808
    %v789 = vunpack.c.0.s8 %v788
    %v790 = vlaneseq
    %v791 = vshrl.u32 %v790, 7
    %v792 = vsub.s32 %v789, %v791
    %v793 = vrot.slane %v679, %v792
    %794 = vrot.lane.b32.xlu0 %v793, 32
    %v795 = vpop.permute.xlu0 %794
    %v797 = vmul.f32 %v762, %v795
    %v798 = vadd.f32 %v786, %v797
    %v801 = vunpack.c.l.s4 1983009808
    %v802 = vunpack.c.0.s8 %v801
    %v803 = vlaneseq
    %v804 = vshrl.u32 %v803, 7
    %v805 = vsub.s32 %v802, %v804
    %v806 = vrot.slane %v798, %v805
    %807 = vrot.lane.b32.xlu0 %v806, 96
    %v808 = vpop.permute.xlu0 %807
    %s810 = scalar_lea.vmem [#allocation9], 4
    %811 = vst.msk [vmem:[%s810] sm:$0x3] %vm417, %v808
    %s812 = scalar_lea.vmem [#allocation2], 20
    %v813 = vld [vmem:[%s812] sm:$0xf]
    %v815 = vcombine.low %v750, %v752
    %v817 = vunpack.c.l.s4 1983009808
    %v818 = vunpack.c.0.s8 %v817
    %v819 = vlaneseq
    %v820 = vshrl.u32 %v819, 7
    %v821 = vsub.s32 %v818, %v820
    %v822 = vrot.slane %v815, %v821
    %v824 = vadd.f32 %v813, %v822
    %v825 = vxor.u32 %v824, 2147483648
    %v826 = vmul.f32 %v825, 1.442695
    %v827 = vpow.pop %v826
    %v828 = vadd.f32 %v827, 1.0
    %v829 = vrcp.pop %v828
    %v830 = vmul.f32 1.0, %v829
    %v832 = vunpack.c.l.s4 1983009808
    %v833 = vunpack.c.0.s8 %v832
    %v834 = vlaneseq
    %v835 = vshrl.u32 %v834, 7
    %v836 = vsub.s32 %v833, %v835
    %v837 = vrot.slane %v752, %v836
    %838 = vrot.lane.b32.xlu0 %v837, 64
    %v839 = vpop.permute.xlu0 %838
    %v841 = vmul.f32 %v830, %v839
    %843 = vrot.lane.b32.xlu0 %v813, 96
    %v844 = vpop.permute.xlu0 %843
    %v845 = vrot.slane %v844, 2
    %848 = vrot.lane.b32.xlu0 %v841, 32
    %v849 = vpop.permute.xlu0 %848
    %v851 = vadd.f32 %v845, %v849
    %v852 = vtanh.pop %v851
    %v854 = vrot.slane %v830, 2
    %v856 = vsub.f32 1.0, %v854
    %v857 = vmul.f32 %v856, %v852
    %858 = vrot.lane.b32.xlu0 %v793, 96
    %v859 = vpop.permute.xlu0 %858
    %v861 = vmul.f32 %v854, %v859
    %v862 = vadd.f32 %v857, %v861
    %v865 = vunpack.c.l.s4 1983009808
    %v866 = vunpack.c.0.s8 %v865
    %v867 = vlaneseq
    %v868 = vshrl.u32 %v867, 7
    %v869 = vsub.s32 %v866, %v868
    %v870 = vrot.slane %v862, %v869
    %871 = vrot.lane.b32.xlu0 %v870, 32
    %v872 = vpop.permute.xlu0 %871
    %s874 = scalar_lea.vmem [#allocation9], 10
    %875 = vst.msk [vmem:[%s874] sm:$0x3] %vm479, %v872
    %v876 = vsel %vm481, %v808, %v872
    %v878 = vsel %vm297, %v876, 0
    %880 = vmatprep.subr.mxu0 %v270
    %881 = vmatpush1.msra.mxu0 %v269
    %882 = vmatprep.subr.mxu0 %v272
    %883 = vmatpush1.msra.mxu0 %v271
    %884 = vmatprep.subr.mxu0 %v274
    %885 = vmatpush1.msra.mxu0 %v273
    %886 = vmatprep.subr.mxu0 %v276
    %887 = vmatpush1.msra.mxu0 %v275
    %888 = vmatprep.subr.mxu0 %v278
    %889 = vmatpush1.msra.mxu0 %v277
    %890 = vmatprep.subr.mxu0 %v280
    %891 = vmatpush1.msra.mxu0 %v279
    %892 = vmatprep.subr.mxu0 %v282
    %893 = vmatpush1.msra.mxu0 %v281
    %894 = vmatprep.subr.mxu0 %v284
    %895 = vmatpush1.msra.mxu0 %v283
    %896 = vmatprep.subr.mxu0 0.0
    %897 = vmatpush1.msra.mxu0 0.0
    %898 = vmatprep.subr.mxu0 0.0
    %899 = vmatpush1.msra.mxu0 0.0
    %900 = vmatprep.subr.mxu0 0.0
    %901 = vmatpush1.msra.mxu0 0.0
    %902 = vmatprep.subr.mxu0 0.0
    %903 = vmatpush1.msra.mxu0 0.0
    %904 = vmatprep.subr.mxu0 0.0
    %905 = vmatpush1.msra.mxu0 0.0
    %906 = vmatprep.subr.mxu0 0.0
    %907 = vmatpush1.msra.mxu0 0.0
    %908 = vmatprep.subr.mxu0 0.0
    %909 = vmatpush1.msra.mxu0 0.0
    %910 = vmatprep.subr.mxu0 0.0
    %911 = vmatpush1.msra.mxu0 0.0
    %912 = vmatprep.subr.mxu0 0.0
    %913 = vmatpush1.msra.mxu0 0.0
    %914 = vmatprep.subr.mxu0 0.0
    %915 = vmatpush1.msra.mxu0 0.0
    %916 = vmatprep.subr.mxu0 0.0
    %917 = vmatpush1.msra.mxu0 0.0
    %918 = vmatprep.subr.mxu0 0.0
    %919 = vmatpush1.msra.mxu0 0.0
    %920 = vmatprep.subr.mxu0 0.0
    %921 = vmatpush1.msra.mxu0 0.0
    %922 = vmatprep.subr.mxu0 0.0
    %923 = vmatpush1.msra.mxu0 0.0
    %924 = vmatprep.subr.mxu0 0.0
    %925 = vmatpush1.msra.mxu0 0.0
    %926 = vmatprep.subr.mxu0 0.0
    %927 = vmatpush1.msra.mxu0 0.0
    %928 = vmatprep.subr.mxu0 0.0
    %929 = vmatpush1.msra.mxu0 0.0
    %930 = vmatprep.subr.mxu0 0.0
    %931 = vmatpush1.msra.mxu0 0.0
    %932 = vmatprep.subr.mxu0 0.0
    %933 = vmatpush1.msra.mxu0 0.0
    %934 = vmatprep.subr.mxu0 0.0
    %935 = vmatpush1.msra.mxu0 0.0
    %936 = vmatprep.subr.mxu0 0.0
    %937 = vmatpush1.msra.mxu0 0.0
    %938 = vmatprep.subr.mxu0 0.0
    %939 = vmatpush1.msra.mxu0 0.0
    %940 = vmatprep.subr.mxu0 0.0
    %941 = vmatpush1.msra.mxu0 0.0
    %942 = vmatprep.subr.mxu0 0.0
    %943 = vmatpush1.msra.mxu0 0.0
    %944 = vmatprep.mubr.f32.mxu0 0.0
    %945 = vmatmul.mubr.f32.gmra.mrb[0].mxu0 %v878
    %v946 = vpop.f32.mrb[0].mxu0
    %v947 = vadd.f32 %v290, %v946
    %v948 = vpop.f32.mrb[0].mxu0
    %v949 = vadd.f32 %v294, %v948
    %950 = vdwg.mxu0
    %s951 = scalar_lea.vmem [#allocation2], 12
    %v952 = vld [vmem:[%s951] sm:$0x3]
    %v953 = vadd.f32 %v952, %v947
    %v954 = vxor.u32 %v953, 2147483648
    %v955 = vmul.f32 %v954, 1.442695
    %v956 = vpow.pop %v955
    %v957 = vadd.f32 %v956, 1.0
    %v958 = vrcp.pop %v957
    %v959 = vmul.f32 1.0, %v958
    %v962 = vunpack.c.l.s4 1983009808
    %v963 = vunpack.c.0.s8 %v962
    %v964 = vlaneseq
    %v965 = vshrl.u32 %v964, 7
    %v966 = vsub.s32 %v963, %v965
    %v967 = vrot.slane %v947, %v966
    %968 = vrot.lane.b32.xlu0 %v967, 64
    %v969 = vpop.permute.xlu0 %968
    %v971 = vmul.f32 %v959, %v969
    %973 = vrot.lane.b32.xlu0 %v971, 64
    %v974 = vpop.permute.xlu0 %973
    %v976 = vadd.f32 %v952, %v974
    %v977 = vtanh.pop %v976
    %v978 = vsub.f32 1.0, %v959
    %980 = vrot.lane.b32.xlu0 %v977, 96
    %v981 = vpop.permute.xlu0 %980
    %v983 = vmul.f32 %v978, %v981
    %v985 = vunpack.c.l.s4 1983009808
    %v986 = vunpack.c.0.s8 %v985
    %v987 = vlaneseq
    %v988 = vshrl.u32 %v987, 7
    %v989 = vsub.s32 %v986, %v988
    %v990 = vrot.slane %v876, %v989
    %991 = vrot.lane.b32.xlu0 %v990, 32
    %v992 = vpop.permute.xlu0 %991
    %v994 = vmul.f32 %v959, %v992
    %v995 = vadd.f32 %v983, %v994
    %v998 = vunpack.c.l.s4 1983009808
    %v999 = vunpack.c.0.s8 %v998
    %v1000 = vlaneseq
    %v1001 = vshrl.u32 %v1000, 7
    %v1002 = vsub.s32 %v999, %v1001
    %v1003 = vrot.slane %v995, %v1002
    %1004 = vrot.lane.b32.xlu0 %v1003, 96
    %v1005 = vpop.permute.xlu0 %1004
    %s1007 = scalar_lea.vmem [#allocation9], 6
    %1008 = vst.msk [vmem:[%s1007] sm:$0x3] %vm417, %v1005
    %s1009 = scalar_lea.vmem [#allocation2], 16
    %v1010 = vld [vmem:[%s1009] sm:$0xf]
    %v1012 = vcombine.low %v947, %v949
    %v1014 = vunpack.c.l.s4 1983009808
    %v1015 = vunpack.c.0.s8 %v1014
    %v1016 = vlaneseq
    %v1017 = vshrl.u32 %v1016, 7
    %v1018 = vsub.s32 %v1015, %v1017
    %v1019 = vrot.slane %v1012, %v1018
    %v1021 = vadd.f32 %v1010, %v1019
    %v1022 = vxor.u32 %v1021, 2147483648
    %v1023 = vmul.f32 %v1022, 1.442695
    %v1024 = vpow.pop %v1023
    %v1025 = vadd.f32 %v1024, 1.0
    %v1026 = vrcp.pop %v1025
    %v1027 = vmul.f32 1.0, %v1026
    %v1029 = vunpack.c.l.s4 1983009808
    %v1030 = vunpack.c.0.s8 %v1029
    %v1031 = vlaneseq
    %v1032 = vshrl.u32 %v1031, 7
    %v1033 = vsub.s32 %v1030, %v1032
    %v1034 = vrot.slane %v949, %v1033
    %1035 = vrot.lane.b32.xlu0 %v1034, 64
    %v1036 = vpop.permute.xlu0 %1035
    %v1038 = vmul.f32 %v1027, %v1036
    %1040 = vrot.lane.b32.xlu0 %v1010, 96
    %v1041 = vpop.permute.xlu0 %1040
    %v1042 = vrot.slane %v1041, 2
    %1045 = vrot.lane.b32.xlu0 %v1038, 32
    %v1046 = vpop.permute.xlu0 %1045
    %v1048 = vadd.f32 %v1042, %v1046
    %v1049 = vtanh.pop %v1048
    %v1051 = vrot.slane %v1027, 2
    %v1053 = vsub.f32 1.0, %v1051
    %v1054 = vmul.f32 %v1053, %v1049
    %1055 = vrot.lane.b32.xlu0 %v990, 96
    %v1056 = vpop.permute.xlu0 %1055
    %v1058 = vmul.f32 %v1051, %v1056
    %v1059 = vadd.f32 %v1054, %v1058
    %v1062 = vunpack.c.l.s4 1983009808
    %v1063 = vunpack.c.0.s8 %v1062
    %v1064 = vlaneseq
    %v1065 = vshrl.u32 %v1064, 7
    %v1066 = vsub.s32 %v1063, %v1065
    %v1067 = vrot.slane %v1059, %v1066
    %1068 = vrot.lane.b32.xlu0 %v1067, 32
    %v1069 = vpop.permute.xlu0 %1068
    %s1071 = scalar_lea.vmem [#allocation9], 8
    %1072 = vst.msk [vmem:[%s1071] sm:$0x3] %vm479, %v1069
    %v1073 = vsel %vm481, %v1005, %v1069
    %v1075 = vsel %vm297, %v1073, 0
    %1077 = vmatprep.subr.mxu0 %v270
    %1078 = vmatpush1.msra.mxu0 %v269
    %1079 = vmatprep.subr.mxu0 %v272
    %1080 = vmatpush1.msra.mxu0 %v271
    %1081 = vmatprep.subr.mxu0 %v274
    %1082 = vmatpush1.msra.mxu0 %v273
    %1083 = vmatprep.subr.mxu0 %v276
    %1084 = vmatpush1.msra.mxu0 %v275
    %1085 = vmatprep.subr.mxu0 %v278
    %1086 = vmatpush1.msra.mxu0 %v277
    %1087 = vmatprep.subr.mxu0 %v280
    %1088 = vmatpush1.msra.mxu0 %v279
    %1089 = vmatprep.subr.mxu0 %v282
    %1090 = vmatpush1.msra.mxu0 %v281
    %1091 = vmatprep.subr.mxu0 %v284
    %1092 = vmatpush1.msra.mxu0 %v283
    %1093 = vmatprep.subr.mxu0 0.0
    %1094 = vmatpush1.msra.mxu0 0.0
    %1095 = vmatprep.subr.mxu0 0.0
    %1096 = vmatpush1.msra.mxu0 0.0
    %1097 = vmatprep.subr.mxu0 0.0
    %1098 = vmatpush1.msra.mxu0 0.0
    %1099 = vmatprep.subr.mxu0 0.0
    %1100 = vmatpush1.msra.mxu0 0.0
    %1101 = vmatprep.subr.mxu0 0.0
    %1102 = vmatpush1.msra.mxu0 0.0
    %1103 = vmatprep.subr.mxu0 0.0
    %1104 = vmatpush1.msra.mxu0 0.0
    %1105 = vmatprep.subr.mxu0 0.0
    %1106 = vmatpush1.msra.mxu0 0.0
    %1107 = vmatprep.subr.mxu0 0.0
    %1108 = vmatpush1.msra.mxu0 0.0
    %1109 = vmatprep.subr.mxu0 0.0
    %1110 = vmatpush1.msra.mxu0 0.0
    %1111 = vmatprep.subr.mxu0 0.0
    %1112 = vmatpush1.msra.mxu0 0.0
    %1113 = vmatprep.subr.mxu0 0.0
    %1114 = vmatpush1.msra.mxu0 0.0
    %1115 = vmatprep.subr.mxu0 0.0
    %1116 = vmatpush1.msra.mxu0 0.0
    %1117 = vmatprep.subr.mxu0 0.0
    %1118 = vmatpush1.msra.mxu0 0.0
    %1119 = vmatprep.subr.mxu0 0.0
    %1120 = vmatpush1.msra.mxu0 0.0
    %1121 = vmatprep.subr.mxu0 0.0
    %1122 = vmatpush1.msra.mxu0 0.0
    %1123 = vmatprep.subr.mxu0 0.0
    %1124 = vmatpush1.msra.mxu0 0.0
    %1125 = vmatprep.subr.mxu0 0.0
    %1126 = vmatpush1.msra.mxu0 0.0
    %1127 = vmatprep.subr.mxu0 0.0
    %1128 = vmatpush1.msra.mxu0 0.0
    %1129 = vmatprep.subr.mxu0 0.0
    %1130 = vmatpush1.msra.mxu0 0.0
    %1131 = vmatprep.subr.mxu0 0.0
    %1132 = vmatpush1.msra.mxu0 0.0
    %1133 = vmatprep.subr.mxu0 0.0
    %1134 = vmatpush1.msra.mxu0 0.0
    %1135 = vmatprep.subr.mxu0 0.0
    %1136 = vmatpush1.msra.mxu0 0.0
    %1137 = vmatprep.subr.mxu0 0.0
    %1138 = vmatpush1.msra.mxu0 0.0
    %1139 = vmatprep.subr.mxu0 0.0
    %1140 = vmatpush1.msra.mxu0 0.0
    %1141 = vmatprep.mubr.f32.mxu0 0.0
    %1142 = vmatmul.mubr.f32.gmra.mrb[0].mxu0 %v1075
    %v1143 = vpop.f32.mrb[0].mxu0
    %v1144 = vadd.f32 %v290, %v1143
    %v1145 = vpop.f32.mrb[0].mxu0
    %v1146 = vadd.f32 %v294, %v1145
    %1147 = vdwg.mxu0
    %v1148 = vld [vmem:[%s1009] sm:$0x3]
    %v1149 = vadd.f32 %v1148, %v1144
    %v1150 = vxor.u32 %v1149, 2147483648
    %v1151 = vmul.f32 %v1150, 1.442695
    %v1152 = vpow.pop %v1151
    %v1153 = vadd.f32 %v1152, 1.0
    %v1154 = vrcp.pop %v1153
    %v1155 = vmul.f32 1.0, %v1154
    %v1158 = vunpack.c.l.s4 1983009808
    %v1159 = vunpack.c.0.s8 %v1158
    %v1160 = vlaneseq
    %v1161 = vshrl.u32 %v1160, 7
    %v1162 = vsub.s32 %v1159, %v1161
    %v1163 = vrot.slane %v1144, %v1162
    %1164 = vrot.lane.b32.xlu0 %v1163, 64
    %v1165 = vpop.permute.xlu0 %1164
    %v1167 = vmul.f32 %v1155, %v1165
    %1169 = vrot.lane.b32.xlu0 %v1167, 64
    %v1170 = vpop.permute.xlu0 %1169
    %v1172 = vadd.f32 %v1148, %v1170
    %v1173 = vtanh.pop %v1172
    %v1174 = vsub.f32 1.0, %v1155
    %1176 = vrot.lane.b32.xlu0 %v1173, 96
    %v1177 = vpop.permute.xlu0 %1176
    %v1179 = vmul.f32 %v1174, %v1177
    %v1181 = vunpack.c.l.s4 1983009808
    %v1182 = vunpack.c.0.s8 %v1181
    %v1183 = vlaneseq
    %v1184 = vshrl.u32 %v1183, 7
    %v1185 = vsub.s32 %v1182, %v1184
    %v1186 = vrot.slane %v1073, %v1185
    %1187 = vrot.lane.b32.xlu0 %v1186, 32
    %v1188 = vpop.permute.xlu0 %1187
    %v1190 = vmul.f32 %v1155, %v1188
    %v1191 = vadd.f32 %v1179, %v1190
    %v1194 = vunpack.c.l.s4 1983009808
    %v1195 = vunpack.c.0.s8 %v1194
    %v1196 = vlaneseq
    %v1197 = vshrl.u32 %v1196, 7
    %v1198 = vsub.s32 %v1195, %v1197
    %v1199 = vrot.slane %v1191, %v1198
    %1200 = vrot.lane.b32.xlu0 %v1199, 96
    %v1201 = vpop.permute.xlu0 %1200
    %1203 = vst.msk [vmem:[%s1071] sm:$0x3] %vm417, %v1201
    %v1204 = vld [vmem:[%s951] sm:$0xf]
    %v1206 = vcombine.low %v1144, %v1146
    %v1208 = vunpack.c.l.s4 1983009808
    %v1209 = vunpack.c.0.s8 %v1208
    %v1210 = vlaneseq
    %v1211 = vshrl.u32 %v1210, 7
    %v1212 = vsub.s32 %v1209, %v1211
    %v1213 = vrot.slane %v1206, %v1212
    %v1215 = vadd.f32 %v1204, %v1213
    %v1216 = vxor.u32 %v1215, 2147483648
    %v1217 = vmul.f32 %v1216, 1.442695
    %v1218 = vpow.pop %v1217
    %v1219 = vadd.f32 %v1218, 1.0
    %v1220 = vrcp.pop %v1219
    %v1221 = vmul.f32 1.0, %v1220
    %v1223 = vunpack.c.l.s4 1983009808
    %v1224 = vunpack.c.0.s8 %v1223
    %v1225 = vlaneseq
    %v1226 = vshrl.u32 %v1225, 7
    %v1227 = vsub.s32 %v1224, %v1226
    %v1228 = vrot.slane %v1146, %v1227
    %1229 = vrot.lane.b32.xlu0 %v1228, 64
    %v1230 = vpop.permute.xlu0 %1229
    %v1232 = vmul.f32 %v1221, %v1230
    %1234 = vrot.lane.b32.xlu0 %v1204, 96
    %v1235 = vpop.permute.xlu0 %1234
    %v1236 = vrot.slane %v1235, 2
    %1239 = vrot.lane.b32.xlu0 %v1232, 32
    %v1240 = vpop.permute.xlu0 %1239
    %v1242 = vadd.f32 %v1236, %v1240
    %v1243 = vtanh.pop %v1242
    %v1245 = vrot.slane %v1221, 2
    %v1247 = vsub.f32 1.0, %v1245
    %v1248 = vmul.f32 %v1247, %v1243
    %1249 = vrot.lane.b32.xlu0 %v1186, 96
    %v1250 = vpop.permute.xlu0 %1249
    %v1252 = vmul.f32 %v1245, %v1250
    %v1253 = vadd.f32 %v1248, %v1252
    %v1256 = vunpack.c.l.s4 1983009808
    %v1257 = vunpack.c.0.s8 %v1256
    %v1258 = vlaneseq
    %v1259 = vshrl.u32 %v1258, 7
    %v1260 = vsub.s32 %v1257, %v1259
    %v1261 = vrot.slane %v1253, %v1260
    %1262 = vrot.lane.b32.xlu0 %v1261, 32
    %v1263 = vpop.permute.xlu0 %1262
    %1265 = vst.msk [vmem:[%s1007] sm:$0x3] %vm479, %v1263
    %v1266 = vsel %vm481, %v1201, %v1263
    %v1268 = vsel %vm297, %v1266, 0
    %1270 = vmatprep.subr.mxu0 %v270
    %1271 = vmatpush1.msra.mxu0 %v269
    %1272 = vmatprep.subr.mxu0 %v272
    %1273 = vmatpush1.msra.mxu0 %v271
    %1274 = vmatprep.subr.mxu0 %v274
    %1275 = vmatpush1.msra.mxu0 %v273
    %1276 = vmatprep.subr.mxu0 %v276
    %1277 = vmatpush1.msra.mxu0 %v275
    %1278 = vmatprep.subr.mxu0 %v278
    %1279 = vmatpush1.msra.mxu0 %v277
    %1280 = vmatprep.subr.mxu0 %v280
    %1281 = vmatpush1.msra.mxu0 %v279
    %1282 = vmatprep.subr.mxu0 %v282
    %1283 = vmatpush1.msra.mxu0 %v281
    %1284 = vmatprep.subr.mxu0 %v284
    %1285 = vmatpush1.msra.mxu0 %v283
    %1286 = vmatprep.subr.mxu0 0.0
    %1287 = vmatpush1.msra.mxu0 0.0
    %1288 = vmatprep.subr.mxu0 0.0
    %1289 = vmatpush1.msra.mxu0 0.0
    %1290 = vmatprep.subr.mxu0 0.0
    %1291 = vmatpush1.msra.mxu0 0.0
    %1292 = vmatprep.subr.mxu0 0.0
    %1293 = vmatpush1.msra.mxu0 0.0
    %1294 = vmatprep.subr.mxu0 0.0
    %1295 = vmatpush1.msra.mxu0 0.0
    %1296 = vmatprep.subr.mxu0 0.0
    %1297 = vmatpush1.msra.mxu0 0.0
    %1298 = vmatprep.subr.mxu0 0.0
    %1299 = vmatpush1.msra.mxu0 0.0
    %1300 = vmatprep.subr.mxu0 0.0
    %1301 = vmatpush1.msra.mxu0 0.0
    %1302 = vmatprep.subr.mxu0 0.0
    %1303 = vmatpush1.msra.mxu0 0.0
    %1304 = vmatprep.subr.mxu0 0.0
    %1305 = vmatpush1.msra.mxu0 0.0
    %1306 = vmatprep.subr.mxu0 0.0
    %1307 = vmatpush1.msra.mxu0 0.0
    %1308 = vmatprep.subr.mxu0 0.0
    %1309 = vmatpush1.msra.mxu0 0.0
    %1310 = vmatprep.subr.mxu0 0.0
    %1311 = vmatpush1.msra.mxu0 0.0
    %1312 = vmatprep.subr.mxu0 0.0
    %1313 = vmatpush1.msra.mxu0 0.0
    %1314 = vmatprep.subr.mxu0 0.0
    %1315 = vmatpush1.msra.mxu0 0.0
    %1316 = vmatprep.subr.mxu0 0.0
    %1317 = vmatpush1.msra.mxu0 0.0
    %1318 = vmatprep.subr.mxu0 0.0
    %1319 = vmatpush1.msra.mxu0 0.0
    %1320 = vmatprep.subr.mxu0 0.0
    %1321 = vmatpush1.msra.mxu0 0.0
    %1322 = vmatprep.subr.mxu0 0.0
    %1323 = vmatpush1.msra.mxu0 0.0
    %1324 = vmatprep.subr.mxu0 0.0
    %1325 = vmatpush1.msra.mxu0 0.0
    %1326 = vmatprep.subr.mxu0 0.0
    %1327 = vmatpush1.msra.mxu0 0.0
    %1328 = vmatprep.subr.mxu0 0.0
    %1329 = vmatpush1.msra.mxu0 0.0
    %1330 = vmatprep.subr.mxu0 0.0
    %1331 = vmatpush1.msra.mxu0 0.0
    %1332 = vmatprep.subr.mxu0 0.0
    %1333 = vmatpush1.msra.mxu0 0.0
    %1334 = vmatprep.mubr.f32.mxu0 0.0
    %1335 = vmatmul.mubr.f32.gmra.mrb[0].mxu0 %v1268
    %v1336 = vpop.f32.mrb[0].mxu0
    %v1337 = vadd.f32 %v290, %v1336
    %v1338 = vpop.f32.mrb[0].mxu0
    %v1339 = vadd.f32 %v294, %v1338
    %1340 = vdwg.mxu0
    %v1341 = vld [vmem:[%s812] sm:$0x3]
    %v1342 = vadd.f32 %v1341, %v1337
    %v1343 = vxor.u32 %v1342, 2147483648
    %v1344 = vmul.f32 %v1343, 1.442695
    %v1345 = vpow.pop %v1344
    %v1346 = vadd.f32 %v1345, 1.0
    %v1347 = vrcp.pop %v1346
    %v1348 = vmul.f32 1.0, %v1347
    %v1351 = vunpack.c.l.s4 1983009808
    %v1352 = vunpack.c.0.s8 %v1351
    %v1353 = vlaneseq
    %v1354 = vshrl.u32 %v1353, 7
    %v1355 = vsub.s32 %v1352, %v1354
    %v1356 = vrot.slane %v1337, %v1355
    %1357 = vrot.lane.b32.xlu0 %v1356, 64
    %v1358 = vpop.permute.xlu0 %1357
    %v1360 = vmul.f32 %v1348, %v1358
    %1362 = vrot.lane.b32.xlu0 %v1360, 64
    %v1363 = vpop.permute.xlu0 %1362
    %v1365 = vadd.f32 %v1341, %v1363
    %v1366 = vtanh.pop %v1365
    %v1367 = vsub.f32 1.0, %v1348
    %1369 = vrot.lane.b32.xlu0 %v1366, 96
    %v1370 = vpop.permute.xlu0 %1369
    %v1372 = vmul.f32 %v1367, %v1370
    %v1374 = vunpack.c.l.s4 1983009808
    %v1375 = vunpack.c.0.s8 %v1374
    %v1376 = vlaneseq
    %v1377 = vshrl.u32 %v1376, 7
    %v1378 = vsub.s32 %v1375, %v1377
    %v1379 = vrot.slane %v1266, %v1378
    %1380 = vrot.lane.b32.xlu0 %v1379, 32
    %v1381 = vpop.permute.xlu0 %1380
    %v1383 = vmul.f32 %v1348, %v1381
    %v1384 = vadd.f32 %v1372, %v1383
    %v1387 = vunpack.c.l.s4 1983009808
    %v1388 = vunpack.c.0.s8 %v1387
    %v1389 = vlaneseq
    %v1390 = vshrl.u32 %v1389, 7
    %v1391 = vsub.s32 %v1388, %v1390
    %v1392 = vrot.slane %v1384, %v1391
    %1393 = vrot.lane.b32.xlu0 %v1392, 96
    %v1394 = vpop.permute.xlu0 %1393
    %1396 = vst.msk [vmem:[%s874] sm:$0x3] %vm417, %v1394
    %v1397 = vld [vmem:[%s754] sm:$0xf]
    %v1399 = vcombine.low %v1337, %v1339
    %v1401 = vunpack.c.l.s4 1983009808
    %v1402 = vunpack.c.0.s8 %v1401
    %v1403 = vlaneseq
    %v1404 = vshrl.u32 %v1403, 7
    %v1405 = vsub.s32 %v1402, %v1404
    %v1406 = vrot.slane %v1399, %v1405
    %v1408 = vadd.f32 %v1397, %v1406
    %v1409 = vxor.u32 %v1408, 2147483648
    %v1410 = vmul.f32 %v1409, 1.442695
    %v1411 = vpow.pop %v1410
    %v1412 = vadd.f32 %v1411, 1.0
    %v1413 = vrcp.pop %v1412
    %v1414 = vmul.f32 1.0, %v1413
    %v1416 = vunpack.c.l.s4 1983009808
    %v1417 = vunpack.c.0.s8 %v1416
    %v1418 = vlaneseq
    %v1419 = vshrl.u32 %v1418, 7
    %v1420 = vsub.s32 %v1417, %v1419
    %v1421 = vrot.slane %v1339, %v1420
    %1422 = vrot.lane.b32.xlu0 %v1421, 64
    %v1423 = vpop.permute.xlu0 %1422
    %v1425 = vmul.f32 %v1414, %v1423
    %1427 = vrot.lane.b32.xlu0 %v1397, 96
    %v1428 = vpop.permute.xlu0 %1427
    %v1429 = vrot.slane %v1428, 2
    %1432 = vrot.lane.b32.xlu0 %v1425, 32
    %v1433 = vpop.permute.xlu0 %1432
    %v1435 = vadd.f32 %v1429, %v1433
    %v1436 = vtanh.pop %v1435
    %v1438 = vrot.slane %v1414, 2
    %v1440 = vsub.f32 1.0, %v1438
    %v1441 = vmul.f32 %v1440, %v1436
    %1442 = vrot.lane.b32.xlu0 %v1379, 96
    %v1443 = vpop.permute.xlu0 %1442
    %v1445 = vmul.f32 %v1438, %v1443
    %v1446 = vadd.f32 %v1441, %v1445
    %v1449 = vunpack.c.l.s4 1983009808
    %v1450 = vunpack.c.0.s8 %v1449
    %v1451 = vlaneseq
    %v1452 = vshrl.u32 %v1451, 7
    %v1453 = vsub.s32 %v1450, %v1452
    %v1454 = vrot.slane %v1446, %v1453
    %1455 = vrot.lane.b32.xlu0 %v1454, 32
    %v1456 = vpop.permute.xlu0 %1455
    %1458 = vst.msk [vmem:[%s810] sm:$0x3] %vm479, %v1456
    %v1459 = vsel %vm481, %v1394, %v1456
    %v1461 = vsel %vm297, %v1459, 0
    %1463 = vmatprep.subr.mxu0 %v270
    %1464 = vmatpush1.msra.mxu0 %v269
    %1465 = vmatprep.subr.mxu0 %v272
    %1466 = vmatpush1.msra.mxu0 %v271
    %1467 = vmatprep.subr.mxu0 %v274
    %1468 = vmatpush1.msra.mxu0 %v273
    %1469 = vmatprep.subr.mxu0 %v276
    %1470 = vmatpush1.msra.mxu0 %v275
    %1471 = vmatprep.subr.mxu0 %v278
    %1472 = vmatpush1.msra.mxu0 %v277
    %1473 = vmatprep.subr.mxu0 %v280
    %1474 = vmatpush1.msra.mxu0 %v279
    %1475 = vmatprep.subr.mxu0 %v282
    %1476 = vmatpush1.msra.mxu0 %v281
    %1477 = vmatprep.subr.mxu0 %v284
    %1478 = vmatpush1.msra.mxu0 %v283
    %1479 = vmatprep.subr.mxu0 0.0
    %1480 = vmatpush1.msra.mxu0 0.0
    %1481 = vmatprep.subr.mxu0 0.0
    %1482 = vmatpush1.msra.mxu0 0.0
    %1483 = vmatprep.subr.mxu0 0.0
    %1484 = vmatpush1.msra.mxu0 0.0
    %1485 = vmatprep.subr.mxu0 0.0
    %1486 = vmatpush1.msra.mxu0 0.0
    %1487 = vmatprep.subr.mxu0 0.0
    %1488 = vmatpush1.msra.mxu0 0.0
    %1489 = vmatprep.subr.mxu0 0.0
    %1490 = vmatpush1.msra.mxu0 0.0
    %1491 = vmatprep.subr.mxu0 0.0
    %1492 = vmatpush1.msra.mxu0 0.0
    %1493 = vmatprep.subr.mxu0 0.0
    %1494 = vmatpush1.msra.mxu0 0.0
    %1495 = vmatprep.subr.mxu0 0.0
    %1496 = vmatpush1.msra.mxu0 0.0
    %1497 = vmatprep.subr.mxu0 0.0
    %1498 = vmatpush1.msra.mxu0 0.0
    %1499 = vmatprep.subr.mxu0 0.0
    %1500 = vmatpush1.msra.mxu0 0.0
    %1501 = vmatprep.subr.mxu0 0.0
    %1502 = vmatpush1.msra.mxu0 0.0
    %1503 = vmatprep.subr.mxu0 0.0
    %1504 = vmatpush1.msra.mxu0 0.0
    %1505 = vmatprep.subr.mxu0 0.0
    %1506 = vmatpush1.msra.mxu0 0.0
    %1507 = vmatprep.subr.mxu0 0.0
    %1508 = vmatpush1.msra.mxu0 0.0
    %1509 = vmatprep.subr.mxu0 0.0
    %1510 = vmatpush1.msra.mxu0 0.0
    %1511 = vmatprep.subr.mxu0 0.0
    %1512 = vmatpush1.msra.mxu0 0.0
    %1513 = vmatprep.subr.mxu0 0.0
    %1514 = vmatpush1.msra.mxu0 0.0
    %1515 = vmatprep.subr.mxu0 0.0
    %1516 = vmatpush1.msra.mxu0 0.0
    %1517 = vmatprep.subr.mxu0 0.0
    %1518 = vmatpush1.msra.mxu0 0.0
    %1519 = vmatprep.subr.mxu0 0.0
    %1520 = vmatpush1.msra.mxu0 0.0
    %1521 = vmatprep.subr.mxu0 0.0
    %1522 = vmatpush1.msra.mxu0 0.0
    %1523 = vmatprep.subr.mxu0 0.0
    %1524 = vmatpush1.msra.mxu0 0.0
    %1525 = vmatprep.subr.mxu0 0.0
    %1526 = vmatpush1.msra.mxu0 0.0
    %1527 = vmatprep.mubr.f32.mxu0 0.0
    %1528 = vmatmul.mubr.f32.gmra.mrb[0].mxu0 %v1461
    %v1529 = vpop.f32.mrb[0].mxu0
    %v1530 = vadd.f32 %v290, %v1529
    %v1531 = vpop.f32.mrb[0].mxu0
    %v1532 = vadd.f32 %v294, %v1531
    %1533 = vdwg.mxu0
    %v1534 = vld [vmem:[%s615] sm:$0x3]
    %v1535 = vadd.f32 %v1534, %v1530
    %v1536 = vxor.u32 %v1535, 2147483648
    %v1537 = vmul.f32 %v1536, 1.442695
    %v1538 = vpow.pop %v1537
    %v1539 = vadd.f32 %v1538, 1.0
    %v1540 = vrcp.pop %v1539
    %v1541 = vmul.f32 1.0, %v1540
    %v1544 = vunpack.c.l.s4 1983009808
    %v1545 = vunpack.c.0.s8 %v1544
    %v1546 = vlaneseq
    %v1547 = vshrl.u32 %v1546, 7
    %v1548 = vsub.s32 %v1545, %v1547
    %v1549 = vrot.slane %v1530, %v1548
    %1550 = vrot.lane.b32.xlu0 %v1549, 64
    %v1551 = vpop.permute.xlu0 %1550
    %v1553 = vmul.f32 %v1541, %v1551
    %1555 = vrot.lane.b32.xlu0 %v1553, 64
    %v1556 = vpop.permute.xlu0 %1555
    %v1558 = vadd.f32 %v1534, %v1556
    %v1559 = vtanh.pop %v1558
    %v1560 = vsub.f32 1.0, %v1541
    %1562 = vrot.lane.b32.xlu0 %v1559, 96
    %v1563 = vpop.permute.xlu0 %1562
    %v1565 = vmul.f32 %v1560, %v1563
    %v1567 = vunpack.c.l.s4 1983009808
    %v1568 = vunpack.c.0.s8 %v1567
    %v1569 = vlaneseq
    %v1570 = vshrl.u32 %v1569, 7
    %v1571 = vsub.s32 %v1568, %v1570
    %v1572 = vrot.slane %v1459, %v1571
    %1573 = vrot.lane.b32.xlu0 %v1572, 32
    %v1574 = vpop.permute.xlu0 %1573
    %v1576 = vmul.f32 %v1541, %v1574
    %v1577 = vadd.f32 %v1565, %v1576
    %v1580 = vunpack.c.l.s4 1983009808
    %v1581 = vunpack.c.0.s8 %v1580
    %v1582 = vlaneseq
    %v1583 = vshrl.u32 %v1582, 7
    %v1584 = vsub.s32 %v1581, %v1583
    %v1585 = vrot.slane %v1577, %v1584
    %1586 = vrot.lane.b32.xlu0 %v1585, 96
    %v1587 = vpop.permute.xlu0 %1586
    %1589 = vst.msk [vmem:[%s677] sm:$0x3] %vm417, %v1587
    %v1590 = vld [vmem:[%s557] sm:$0xf]
    %v1592 = vcombine.low %v1530, %v1532
    %v1594 = vunpack.c.l.s4 1983009808
    %v1595 = vunpack.c.0.s8 %v1594
    %v1596 = vlaneseq
    %v1597 = vshrl.u32 %v1596, 7
    %v1598 = vsub.s32 %v1595, %v1597
    %v1599 = vrot.slane %v1592, %v1598
    %v1601 = vadd.f32 %v1590, %v1599
    %v1602 = vxor.u32 %v1601, 2147483648
    %v1603 = vmul.f32 %v1602, 1.442695
    %v1604 = vpow.pop %v1603
    %v1605 = vadd.f32 %v1604, 1.0
    %v1606 = vrcp.pop %v1605
    %v1607 = vmul.f32 1.0, %v1606
    %v1609 = vunpack.c.l.s4 1983009808
    %v1610 = vunpack.c.0.s8 %v1609
    %v1611 = vlaneseq
    %v1612 = vshrl.u32 %v1611, 7
    %v1613 = vsub.s32 %v1610, %v1612
    %v1614 = vrot.slane %v1532, %v1613
    %1615 = vrot.lane.b32.xlu0 %v1614, 64
    %v1616 = vpop.permute.xlu0 %1615
    %v1618 = vmul.f32 %v1607, %v1616
    %1620 = vrot.lane.b32.xlu0 %v1590, 96
    %v1621 = vpop.permute.xlu0 %1620
    %v1622 = vrot.slane %v1621, 2
    %1625 = vrot.lane.b32.xlu0 %v1618, 32
    %v1626 = vpop.permute.xlu0 %1625
    %v1628 = vadd.f32 %v1622, %v1626
    %v1629 = vtanh.pop %v1628
    %v1631 = vrot.slane %v1607, 2
    %v1633 = vsub.f32 1.0, %v1631
    %v1634 = vmul.f32 %v1633, %v1629
    %1635 = vrot.lane.b32.xlu0 %v1572, 96
    %v1636 = vpop.permute.xlu0 %1635
    %v1638 = vmul.f32 %v1631, %v1636
    %v1639 = vadd.f32 %v1634, %v1638
    %v1642 = vunpack.c.l.s4 1983009808
    %v1643 = vunpack.c.0.s8 %v1642
    %v1644 = vlaneseq
    %v1645 = vshrl.u32 %v1644, 7
    %v1646 = vsub.s32 %v1643, %v1645
    %v1647 = vrot.slane %v1639, %v1646
    %1648 = vrot.lane.b32.xlu0 %v1647, 32
    %v1649 = vpop.permute.xlu0 %1648
    %1651 = vst.msk [vmem:[%s613] sm:$0x3] %vm479, %v1649
    %v1652 = vsel %vm481, %v1587, %v1649
    %v1654 = vsel %vm297, %v1652, 0
    %1656 = vmatprep.subr.mxu0 %v270
    %1657 = vmatpush1.msra.mxu0 %v269
    %1658 = vmatprep.subr.mxu0 %v272
    %1659 = vmatpush1.msra.mxu0 %v271
    %1660 = vmatprep.subr.mxu0 %v274
    %1661 = vmatpush1.msra.mxu0 %v273
    %1662 = vmatprep.subr.mxu0 %v276
    %1663 = vmatpush1.msra.mxu0 %v275
    %1664 = vmatprep.subr.mxu0 %v278
    %1665 = vmatpush1.msra.mxu0 %v277
    %1666 = vmatprep.subr.mxu0 %v280
    %1667 = vmatpush1.msra.mxu0 %v279
    %1668 = vmatprep.subr.mxu0 %v282
    %1669 = vmatpush1.msra.mxu0 %v281
    %1670 = vmatprep.subr.mxu0 %v284
    %1671 = vmatpush1.msra.mxu0 %v283
    %1672 = vmatprep.subr.mxu0 0.0
    %1673 = vmatpush1.msra.mxu0 0.0
    %1674 = vmatprep.subr.mxu0 0.0
    %1675 = vmatpush1.msra.mxu0 0.0
    %1676 = vmatprep.subr.mxu0 0.0
    %1677 = vmatpush1.msra.mxu0 0.0
    %1678 = vmatprep.subr.mxu0 0.0
    %1679 = vmatpush1.msra.mxu0 0.0
    %1680 = vmatprep.subr.mxu0 0.0
    %1681 = vmatpush1.msra.mxu0 0.0
    %1682 = vmatprep.subr.mxu0 0.0
    %1683 = vmatpush1.msra.mxu0 0.0
    %1684 = vmatprep.subr.mxu0 0.0
    %1685 = vmatpush1.msra.mxu0 0.0
    %1686 = vmatprep.subr.mxu0 0.0
    %1687 = vmatpush1.msra.mxu0 0.0
    %1688 = vmatprep.subr.mxu0 0.0
    %1689 = vmatpush1.msra.mxu0 0.0
    %1690 = vmatprep.subr.mxu0 0.0
    %1691 = vmatpush1.msra.mxu0 0.0
    %1692 = vmatprep.subr.mxu0 0.0
    %1693 = vmatpush1.msra.mxu0 0.0
    %1694 = vmatprep.subr.mxu0 0.0
    %1695 = vmatpush1.msra.mxu0 0.0
    %1696 = vmatprep.subr.mxu0 0.0
    %1697 = vmatpush1.msra.mxu0 0.0
    %1698 = vmatprep.subr.mxu0 0.0
    %1699 = vmatpush1.msra.mxu0 0.0
    %1700 = vmatprep.subr.mxu0 0.0
    %1701 = vmatpush1.msra.mxu0 0.0
    %1702 = vmatprep.subr.mxu0 0.0
    %1703 = vmatpush1.msra.mxu0 0.0
    %1704 = vmatprep.subr.mxu0 0.0
    %1705 = vmatpush1.msra.mxu0 0.0
    %1706 = vmatprep.subr.mxu0 0.0
    %1707 = vmatpush1.msra.mxu0 0.0
    %1708 = vmatprep.subr.mxu0 0.0
    %1709 = vmatpush1.msra.mxu0 0.0
    %1710 = vmatprep.subr.mxu0 0.0
    %1711 = vmatpush1.msra.mxu0 0.0
    %1712 = vmatprep.subr.mxu0 0.0
    %1713 = vmatpush1.msra.mxu0 0.0
    %1714 = vmatprep.subr.mxu0 0.0
    %1715 = vmatpush1.msra.mxu0 0.0
    %1716 = vmatprep.subr.mxu0 0.0
    %1717 = vmatpush1.msra.mxu0 0.0
    %1718 = vmatprep.subr.mxu0 0.0
    %1719 = vmatpush1.msra.mxu0 0.0
    %1720 = vmatprep.mubr.f32.mxu0 0.0
    %1721 = vmatmul.mubr.f32.gmra.mrb[0].mxu0 %v1654
    %v1722 = vpop.f32.mrb[0].mxu0
    %v1723 = vadd.f32 %v290, %v1722
    %v1724 = vpop.f32.mrb[0].mxu0
    %v1725 = vadd.f32 %v294, %v1724
    %1726 = vdwg.mxu0
    %v1727 = vld [vmem:[%s419] sm:$0x3]
    %v1728 = vadd.f32 %v1727, %v1723
    %v1729 = vxor.u32 %v1728, 2147483648
    %v1730 = vmul.f32 %v1729, 1.442695
    %v1731 = vpow.pop %v1730
    %v1732 = vadd.f32 %v1731, 1.0
    %v1733 = vrcp.pop %v1732
    %v1734 = vmul.f32 1.0, %v1733
    %v1737 = vunpack.c.l.s4 1983009808
    %v1738 = vunpack.c.0.s8 %v1737
    %v1739 = vlaneseq
    %v1740 = vshrl.u32 %v1739, 7
    %v1741 = vsub.s32 %v1738, %v1740
    %v1742 = vrot.slane %v1723, %v1741
    %1743 = vrot.lane.b32.xlu0 %v1742, 64
    %v1744 = vpop.permute.xlu0 %1743
    %v1746 = vmul.f32 %v1734, %v1744
    %1748 = vrot.lane.b32.xlu0 %v1746, 64
    %v1749 = vpop.permute.xlu0 %1748
    %v1751 = vadd.f32 %v1727, %v1749
    %v1752 = vtanh.pop %v1751
    %v1753 = vsub.f32 1.0, %v1734
    %1755 = vrot.lane.b32.xlu0 %v1752, 96
    %v1756 = vpop.permute.xlu0 %1755
    %v1758 = vmul.f32 %v1753, %v1756
    %v1760 = vunpack.c.l.s4 1983009808
    %v1761 = vunpack.c.0.s8 %v1760
    %v1762 = vlaneseq
    %v1763 = vshrl.u32 %v1762, 7
    %v1764 = vsub.s32 %v1761, %v1763
    %v1765 = vrot.slane %v1652, %v1764
    %1766 = vrot.lane.b32.xlu0 %v1765, 32
    %v1767 = vpop.permute.xlu0 %1766
    %v1769 = vmul.f32 %v1734, %v1767
    %v1770 = vadd.f32 %v1758, %v1769
    %v1773 = vunpack.c.l.s4 1983009808
    %v1774 = vunpack.c.0.s8 %v1773
    %v1775 = vlaneseq
    %v1776 = vshrl.u32 %v1775, 7
    %v1777 = vsub.s32 %v1774, %v1776
    %v1778 = vrot.slane %v1770, %v1777
    %1779 = vrot.lane.b32.xlu0 %v1778, 96
    %v1780 = vpop.permute.xlu0 %1779
    %1782 = vst.msk [vmem:[%s478] sm:$0x3] %vm417, %v1780
    %v1783 = vld [vmem:[#allocation2] sm:$0xf]
    %v1785 = vcombine.low %v1723, %v1725
    %v1787 = vunpack.c.l.s4 1983009808
    %v1788 = vunpack.c.0.s8 %v1787
    %v1789 = vlaneseq
    %v1790 = vshrl.u32 %v1789, 7
    %v1791 = vsub.s32 %v1788, %v1790
    %v1792 = vrot.slane %v1785, %v1791
    %v1794 = vadd.f32 %v1783, %v1792
    %v1795 = vxor.u32 %v1794, 2147483648
    %v1796 = vmul.f32 %v1795, 1.442695
    %v1797 = vpow.pop %v1796
    %v1798 = vadd.f32 %v1797, 1.0
    %v1799 = vrcp.pop %v1798
    %v1800 = vmul.f32 1.0, %v1799
    %v1802 = vunpack.c.l.s4 1983009808
    %v1803 = vunpack.c.0.s8 %v1802
    %v1804 = vlaneseq
    %v1805 = vshrl.u32 %v1804, 7
    %v1806 = vsub.s32 %v1803, %v1805
    %v1807 = vrot.slane %v1725, %v1806
    %1808 = vrot.lane.b32.xlu0 %v1807, 64
    %v1809 = vpop.permute.xlu0 %1808
    %v1811 = vmul.f32 %v1800, %v1809
    %1813 = vrot.lane.b32.xlu0 %v1783, 96
    %v1814 = vpop.permute.xlu0 %1813
    %v1815 = vrot.slane %v1814, 2
    %1818 = vrot.lane.b32.xlu0 %v1811, 32
    %v1819 = vpop.permute.xlu0 %1818
    %v1821 = vadd.f32 %v1815, %v1819
    %v1822 = vtanh.pop %v1821
    %v1824 = vrot.slane %v1800, 2
    %v1826 = vsub.f32 1.0, %v1824
    %v1827 = vmul.f32 %v1826, %v1822
    %1828 = vrot.lane.b32.xlu0 %v1765, 96
    %v1829 = vpop.permute.xlu0 %1828
    %v1831 = vmul.f32 %v1824, %v1829
    %v1832 = vadd.f32 %v1827, %v1831
    %v1835 = vunpack.c.l.s4 1983009808
    %v1836 = vunpack.c.0.s8 %v1835
    %v1837 = vlaneseq
    %v1838 = vshrl.u32 %v1837, 7
    %v1839 = vsub.s32 %v1836, %v1838
    %v1840 = vrot.slane %v1832, %v1839
    %1841 = vrot.lane.b32.xlu0 %v1840, 32
    %v1842 = vpop.permute.xlu0 %1841
    %1844 = vst.msk [vmem:[#allocation9] sm:$0x3] %vm479, %v1842
    // Predicated region
    $region34: #{tpu_custom_call.1} parent=1 // pred_check
      _
    $region35: #{tpu_custom_call.1} parent=1 // pred_check_branch
      %1846 = sbr.rel (0) target = $region37
    $region36: #{tpu_custom_call.1} parent=1 // pred_region
      %s1848 = ssub.s32 256, 256
      %1849 = vsyncadd [#allocation5], %s1848
      %s1850 = sshll.u32 [#allocation9], 4
      %s1851 = int_to_ptr.vmem [resolvable:$true] %s1850
      %1856 = dma.vmem_to_hbm [thread:$0]  %s1851, 256, %s5, [#allocation5], 32, 32, 2
    $region37: #{tpu_custom_call.1} parent=1 // pred_fallthru
      _
    // Predicated region
    $region38: #{tpu_custom_call.1} parent=1 // pred_check
      _
    $region39: #{tpu_custom_call.1} parent=1 // pred_check_branch
      %1858 = sbr.rel (0) target = $region41
    $region40: #{tpu_custom_call.1} parent=1 // pred_region
      %1859 = dma.done [#allocation5], 256
    $region41: #{tpu_custom_call.1} parent=1 // pred_fallthru
      _
    %1860 = vsyncpa [#allocation4], 1
    %1861 = vsyncpa [#allocation7], 1
    %1862 = vsyncpa [#allocation5], 1

</llo_original>
